<compile_context>
chip_gen: v6e
topology: v6e:2x2x1
jax: 0.10.0
libtpu: 0.0.40
codegen_flags: <defaults>
</compile_context>

<pallas_src>
import jax
import jax.numpy as jnp
from jax.experimental import pallas as pl
from jax.experimental.pallas import tpu as pltpu


def _round_up(x, m):
    return ((x + m - 1) // m) * m


# -----------------------------------------------------------------------------
# Kernel
# -----------------------------------------------------------------------------
def _make_kernel(n_input, block_flags, pad):
    """Kernel specialized for one architecture.

    block_flags: tuple of has_shortcut per residual block.  Slab entry order
    per block is [W1, (Ws)?, W2]; the last entry is the final Linear, already
    placed at output columns [1+n_input : ...] with bias[0] = 1.0.
    All slab entries are (pad, pad) with exact zero padding, so padded lanes
    stay identically zero through every matmul / bias / tanh.
    """

    def kernel(x_ref, w_ref, b_ref, out_ref):
        x = x_ref[...].astype(jnp.float32)               # (tb, n_input)
        tb = x.shape[0]
        # Lane-pad the input once; padding lanes are exactly zero and remain
        # zero through the whole network.
        xp = jnp.concatenate(
            [x, jnp.zeros((tb, pad - n_input), jnp.float32)], axis=1)

        h = xp
        li = 0  # static Python index into the slabs

        # Residual blocks: tanh(linear2(tanh(linear1(h))) + shortcut(h))
        for has_shortcut in block_flags:
            z1 = (jnp.dot(h, w_ref[li], preferred_element_type=jnp.float32)
                  + b_ref[li])
            li += 1
            if has_shortcut:
                identity = (jnp.dot(h, w_ref[li],
                                    preferred_element_type=jnp.float32)
                            + b_ref[li])
                li += 1
            else:
                identity = h
            o1 = jnp.tanh(z1)
            z2 = (jnp.dot(o1, w_ref[li], preferred_element_type=jnp.float32)
                  + b_ref[li] + identity)
            li += 1
            h = jnp.tanh(z2)

        # Final Linear, pre-placed at output columns [1+n_input : ...] and with
        # the constant-1 column baked into its bias (column 0).
        out = (jnp.dot(h, w_ref[li], preferred_element_type=jnp.float32)
               + b_ref[li])

        # Inject the x passthrough into columns [1 : 1+n_input] with a single
        # 1-lane rotate (lane pad-1 of xp is zero, so column 0 stays the bias 1).
        out_ref[...] = out + pltpu.roll(xp, shift=1, axis=1)

    return kernel


# -----------------------------------------------------------------------------
# Parameter construction (deterministic, torch.nn.Linear-style init)
# -----------------------------------------------------------------------------
def init_params(key, n_input, n_output, hidden_sizes, n_nontrainable):
    """Flat list: per-block [W1, b1, W2, b2, (Ws, bs)?], then [Wf, bf].
    Weights are (in, out); biases (1, out)."""
    n_net_out = n_output - n_nontrainable
    params = []

    def linear(key, n_in, n_out):
        kw, kb = jax.random.split(key)
        bound = 1.0 / jnp.sqrt(jnp.float32(n_in))
        w = jax.random.uniform(kw, (n_in, n_out), jnp.float32, -bound, bound)
        b = jax.random.uniform(kb, (1, n_out), jnp.float32, -bound, bound)
        return w, b

    in_size = n_input
    for hsz in hidden_sizes:
        key, k1, k2, k3 = jax.random.split(key, 4)
        w1, b1 = linear(k1, in_size, hsz)
        w2, b2 = linear(k2, hsz, hsz)
        params += [w1, b1, w2, b2]
        if in_size != hsz:
            ws, bs = linear(k3, in_size, hsz)
            params += [ws, bs]
        in_size = hsz

    key, kf = jax.random.split(key)
    wf, bf = linear(kf, in_size, n_net_out)
    params += [wf, bf]
    return params


# -----------------------------------------------------------------------------
# Parameter packing: flat torch-style params -> two padded VMEM-resident slabs
# -----------------------------------------------------------------------------
def pack_params(params, n_input, hidden_sizes, n_net_out):
    entries = []      # (W (k, n), b (n,), output-column offset)
    block_flags = []  # has_shortcut per block
    idx = 0
    in_size = n_input
    for hsz in hidden_sizes:
        w1, b1, w2, b2 = params[idx:idx + 4]
        idx += 4
        has_shortcut = in_size != hsz
        entries.append((w1, jnp.reshape(b1, (-1,)), 0))
        if has_shortcut:
            ws, bs = params[idx:idx + 2]
            idx += 2
            entries.append((ws, jnp.reshape(bs, (-1,)), 0))
        entries.append((w2, jnp.reshape(b2, (-1,)), 0))
        block_flags.append(has_shortcut)
        in_size = hsz

    # Final Linear, placed directly at its output-row position.
    wf, bf = params[idx:idx + 2]
    out_offset = 1 + n_input
    entries.append((wf, jnp.reshape(bf, (-1,)), out_offset))

    out_dim = 1 + n_input + n_net_out
    max_dim = max(max(w.shape[0], w.shape[1] + off) for w, _, off in entries)
    pad = _round_up(max(128, max_dim, out_dim), 128)

    num_layers = len(entries)
    w_slab = jnp.zeros((num_layers, pad, pad), jnp.float32)
    b_slab = jnp.zeros((num_layers, 1, pad), jnp.float32)
    for i, (w, b, off) in enumerate(entries):
        w_slab = w_slab.at[i, :w.shape[0], off:off + w.shape[1]].set(
            w.astype(jnp.float32))
        b_slab = b_slab.at[i, 0, off:off + b.shape[0]].set(
            b.astype(jnp.float32))
    # Constant-1 column of the output row lives in the final entry's bias.
    b_slab = b_slab.at[num_layers - 1, 0, 0].set(1.0)

    return w_slab, b_slab, tuple(block_flags), pad


# -----------------------------------------------------------------------------
# Wrapper: batch-tiled pallas_call with VMEM-resident weight slabs
# -----------------------------------------------------------------------------
def tanh_resnet_with_nontrainable(x, w_slab, b_slab, block_flags,
                                  n_input, n_net_out, *, block_batch=256):
    batch = x.shape[0]
    pad = w_slab.shape[-1]
    out_dim = 1 + n_input + n_net_out

    # Batch tile: multiple of 8 (sublanes); 256 matches the v6e/v7x MXU.
    tb = max(8, min(block_batch, _round_up(batch, 8)))
    padded_batch = _round_up(batch, tb)
    if padded_batch != batch:
        x = jnp.pad(x, ((0, padded_batch - batch), (0, 0)))
    grid = (padded_batch // tb,)

    kernel = _make_kernel(n_input, block_flags, pad)

    out = pl.pallas_call(
        kernel,
        out_shape=jax.ShapeDtypeStruct((padded_batch, pad), jnp.float32),
        grid=grid,
        in_specs=[
            # Batch-tiled activations.
            pl.BlockSpec((tb, n_input), lambda i: (i, 0)),
            # Weight / bias slabs: constant index_map -> stay VMEM-resident.
            pl.BlockSpec(w_slab.shape, lambda i: (0, 0, 0)),
            pl.BlockSpec(b_slab.shape, lambda i: (0, 0, 0)),
        ],
        out_specs=pl.BlockSpec((tb, pad), lambda i: (i, 0)),
        compiler_params=pltpu.CompilerParams(
            dimension_semantics=("parallel",)),
    )(x, w_slab, b_slab)

    return out[:batch, :out_dim]


# -----------------------------------------------------------------------------
# Pure-JAX reference (for correctness check)
# -----------------------------------------------------------------------------
def reference_forward(x, params, n_input, n_output, hidden_sizes,
                      n_nontrainable):
    h = x
    idx = 0
    in_size = n_input
    for hsz in hidden_sizes:
        w1, b1, w2, b2 = params[idx:idx + 4]
        idx += 4
        if in_size != hsz:
            ws, bs = params[idx:idx + 2]
            idx += 2
            identity = h @ ws + bs
        else:
            identity = h
        o = jnp.tanh(h @ w1 + b1)
        o = o @ w2 + b2 + identity
        h = jnp.tanh(o)
        in_size = hsz
    wf, bf = params[idx:idx + 2]
    net = h @ wf + bf
    ones = jnp.ones((x.shape[0], 1), jnp.float32)
    return jnp.concatenate([ones, x, net], axis=1)


# -----------------------------------------------------------------------------
if __name__ == "__main__":
    # Architecture (Koopman dictionary style):
    #   n_input=4, hidden_layer_sizes=[32, 32]
    #   n_nontrainable = 1 + n_input = 5 (constant + identity features)
    #   n_output = 13  ->  trainable net output dim = 8
    n_input = 4
    hidden_sizes = (32, 32)
    n_nontrainable = 1 + n_input
    n_output = n_nontrainable + 8
    n_net_out = n_output - n_nontrainable
    batch = 512          # exercises the batch grid (2 tiles of 256)

    key = jax.random.PRNGKey(0)
    key, kx, kp = jax.random.split(key, 3)
    x = jax.random.normal(kx, (batch, n_input), jnp.float32)
    params = init_params(kp, n_input, n_output, hidden_sizes, n_nontrainable)

    # Pack once (outside the hot path).
    w_slab, b_slab, block_flags, pad = pack_params(
        params, n_input, hidden_sizes, n_net_out)

    out = tanh_resnet_with_nontrainable(
        x, w_slab, b_slab, block_flags, n_input, n_net_out, block_batch=256)
    out = jax.block_until_ready(out)

    ref = reference_forward(
        x, params, n_input, n_output, hidden_sizes, n_nontrainable)

    assert out.shape == (batch, 1 + n_input + n_net_out), out.shape
    assert jnp.allclose(out, ref, atol=1e-5, rtol=1e-5), "mismatch vs reference"

    print("KERNEL_OK")
</pallas_src>

<mosaic_0001>
module attributes {stable_mosaic.version = 11 : i64} {
  func.func @kernel(%arg0: i32, %arg1: memref<256x4xf32, #tpu.memory_space<vmem>>, %arg2: memref<6x128x128xf32, #tpu.memory_space<vmem>>, %arg3: memref<6x1x128xf32, #tpu.memory_space<vmem>>, %arg4: memref<256x128xf32, #tpu.memory_space<vmem>>) attributes {dimension_semantics = [#tpu.dimension_semantics<parallel>], iteration_bounds = array<i64: 2>, scalar_prefetch = 0 : i64, scratch_operands = 0 : i64, tpu.core_type = #tpu.core_type<tc>, window_params = [{transform_indices = @transform_0, window_bounds = array<i64: 256, 4>}, {pipeline_mode = #tpu.pipeline_mode<synchronous>, transform_indices = @transform_1, window_bounds = array<i64: 6, 128, 128>}, {pipeline_mode = #tpu.pipeline_mode<synchronous>, transform_indices = @transform_2, window_bounds = array<i64: 6, 1, 128>}, {transform_indices = @transform_3, window_bounds = array<i64: 256, 128>}]} {
    %c0 = arith.constant 0 : index
    %c0_0 = arith.constant 0 : index
    %0 = vector.load %arg1[%c0, %c0_0] : memref<256x4xf32, #tpu.memory_space<vmem>>, vector<256x4xf32>
    %cst = arith.constant 0.000000e+00 : f32
    %1 = vector.broadcast %cst : f32 to vector<256x124xf32>
    %2 = tpu.concatenate %0, %1 in 1 : vector<256x4xf32>, vector<256x124xf32> -> vector<256x128xf32>
    %c0_1 = arith.constant 0 : index
    %c0_2 = arith.constant 0 : index
    %c0_3 = arith.constant 0 : index
    %3 = vector.load %arg2[%c0_1, %c0_2, %c0_3] : memref<6x128x128xf32, #tpu.memory_space<vmem>>, vector<1x128x128xf32>
    %4 = vector.shape_cast %3 : vector<1x128x128xf32> to vector<128x128xf32>
    %cst_4 = arith.constant dense<0.000000e+00> : vector<256x128xf32>
    %5 = tpu.matmul %2, %4, %cst_4 {dimension_numbers = #tpu.dot_dimension_numbers<[1], [0], [0], [1], [0, 0, 1, 1], [], []>} : vector<256x128xf32>, vector<128x128xf32>, vector<256x128xf32> -> vector<256x128xf32>
    %c0_5 = arith.constant 0 : index
    %c0_6 = arith.constant 0 : index
    %c0_7 = arith.constant 0 : index
    %6 = vector.load %arg3[%c0_5, %c0_6, %c0_7] : memref<6x1x128xf32, #tpu.memory_space<vmem>>, vector<1x1x128xf32>
    %7 = vector.shape_cast %6 : vector<1x1x128xf32> to vector<1x128xf32>
    %8 = vector.broadcast %7 : vector<1x128xf32> to vector<256x128xf32>
    %9 = arith.addf %5, %8 : vector<256x128xf32>
    %c1 = arith.constant 1 : index
    %c0_8 = arith.constant 0 : index
    %c0_9 = arith.constant 0 : index
    %10 = vector.load %arg2[%c1, %c0_8, %c0_9] : memref<6x128x128xf32, #tpu.memory_space<vmem>>, vector<1x128x128xf32>
    %11 = vector.shape_cast %10 : vector<1x128x128xf32> to vector<128x128xf32>
    %cst_10 = arith.constant dense<0.000000e+00> : vector<256x128xf32>
    %12 = tpu.matmul %2, %11, %cst_10 {dimension_numbers = #tpu.dot_dimension_numbers<[1], [0], [0], [1], [0, 0, 1, 1], [], []>} : vector<256x128xf32>, vector<128x128xf32>, vector<256x128xf32> -> vector<256x128xf32>
    %c1_11 = arith.constant 1 : index
    %c0_12 = arith.constant 0 : index
    %c0_13 = arith.constant 0 : index
    %13 = vector.load %arg3[%c1_11, %c0_12, %c0_13] : memref<6x1x128xf32, #tpu.memory_space<vmem>>, vector<1x1x128xf32>
    %14 = vector.shape_cast %13 : vector<1x1x128xf32> to vector<1x128xf32>
    %15 = vector.broadcast %14 : vector<1x128xf32> to vector<256x128xf32>
    %16 = arith.addf %12, %15 : vector<256x128xf32>
    %17 = math.tanh %9 : vector<256x128xf32>
    %c2 = arith.constant 2 : index
    %c0_14 = arith.constant 0 : index
    %c0_15 = arith.constant 0 : index
    %18 = vector.load %arg2[%c2, %c0_14, %c0_15] : memref<6x128x128xf32, #tpu.memory_space<vmem>>, vector<1x128x128xf32>
    %19 = vector.shape_cast %18 : vector<1x128x128xf32> to vector<128x128xf32>
    %cst_16 = arith.constant dense<0.000000e+00> : vector<256x128xf32>
    %20 = tpu.matmul %17, %19, %cst_16 {dimension_numbers = #tpu.dot_dimension_numbers<[1], [0], [0], [1], [0, 0, 1, 1], [], []>} : vector<256x128xf32>, vector<128x128xf32>, vector<256x128xf32> -> vector<256x128xf32>
    %c2_17 = arith.constant 2 : index
    %c0_18 = arith.constant 0 : index
    %c0_19 = arith.constant 0 : index
    %21 = vector.load %arg3[%c2_17, %c0_18, %c0_19] : memref<6x1x128xf32, #tpu.memory_space<vmem>>, vector<1x1x128xf32>
    %22 = vector.shape_cast %21 : vector<1x1x128xf32> to vector<1x128xf32>
    %23 = vector.broadcast %22 : vector<1x128xf32> to vector<256x128xf32>
    %24 = arith.addf %20, %23 : vector<256x128xf32>
    %25 = arith.addf %24, %16 : vector<256x128xf32>
    %26 = math.tanh %25 : vector<256x128xf32>
    %c3 = arith.constant 3 : index
    %c0_20 = arith.constant 0 : index
    %c0_21 = arith.constant 0 : index
    %27 = vector.load %arg2[%c3, %c0_20, %c0_21] : memref<6x128x128xf32, #tpu.memory_space<vmem>>, vector<1x128x128xf32>
    %28 = vector.shape_cast %27 : vector<1x128x128xf32> to vector<128x128xf32>
    %cst_22 = arith.constant dense<0.000000e+00> : vector<256x128xf32>
    %29 = tpu.matmul %26, %28, %cst_22 {dimension_numbers = #tpu.dot_dimension_numbers<[1], [0], [0], [1], [0, 0, 1, 1], [], []>} : vector<256x128xf32>, vector<128x128xf32>, vector<256x128xf32> -> vector<256x128xf32>
    %c3_23 = arith.constant 3 : index
    %c0_24 = arith.constant 0 : index
    %c0_25 = arith.constant 0 : index
    %30 = vector.load %arg3[%c3_23, %c0_24, %c0_25] : memref<6x1x128xf32, #tpu.memory_space<vmem>>, vector<1x1x128xf32>
    %31 = vector.shape_cast %30 : vector<1x1x128xf32> to vector<1x128xf32>
    %32 = vector.broadcast %31 : vector<1x128xf32> to vector<256x128xf32>
    %33 = arith.addf %29, %32 : vector<256x128xf32>
    %34 = math.tanh %33 : vector<256x128xf32>
    %c4 = arith.constant 4 : index
    %c0_26 = arith.constant 0 : index
    %c0_27 = arith.constant 0 : index
    %35 = vector.load %arg2[%c4, %c0_26, %c0_27] : memref<6x128x128xf32, #tpu.memory_space<vmem>>, vector<1x128x128xf32>
    %36 = vector.shape_cast %35 : vector<1x128x128xf32> to vector<128x128xf32>
    %cst_28 = arith.constant dense<0.000000e+00> : vector<256x128xf32>
    %37 = tpu.matmul %34, %36, %cst_28 {dimension_numbers = #tpu.dot_dimension_numbers<[1], [0], [0], [1], [0, 0, 1, 1], [], []>} : vector<256x128xf32>, vector<128x128xf32>, vector<256x128xf32> -> vector<256x128xf32>
    %c4_29 = arith.constant 4 : index
    %c0_30 = arith.constant 0 : index
    %c0_31 = arith.constant 0 : index
    %38 = vector.load %arg3[%c4_29, %c0_30, %c0_31] : memref<6x1x128xf32, #tpu.memory_space<vmem>>, vector<1x1x128xf32>
    %39 = vector.shape_cast %38 : vector<1x1x128xf32> to vector<1x128xf32>
    %40 = vector.broadcast %39 : vector<1x128xf32> to vector<256x128xf32>
    %41 = arith.addf %37, %40 : vector<256x128xf32>
    %42 = arith.addf %41, %26 : vector<256x128xf32>
    %43 = math.tanh %42 : vector<256x128xf32>
    %c5 = arith.constant 5 : index
    %c0_32 = arith.constant 0 : index
    %c0_33 = arith.constant 0 : index
    %44 = vector.load %arg2[%c5, %c0_32, %c0_33] : memref<6x128x128xf32, #tpu.memory_space<vmem>>, vector<1x128x128xf32>
    %45 = vector.shape_cast %44 : vector<1x128x128xf32> to vector<128x128xf32>
    %cst_34 = arith.constant dense<0.000000e+00> : vector<256x128xf32>
    %46 = tpu.matmul %43, %45, %cst_34 {dimension_numbers = #tpu.dot_dimension_numbers<[1], [0], [0], [1], [0, 0, 1, 1], [], []>} : vector<256x128xf32>, vector<128x128xf32>, vector<256x128xf32> -> vector<256x128xf32>
    %c5_35 = arith.constant 5 : index
    %c0_36 = arith.constant 0 : index
    %c0_37 = arith.constant 0 : index
    %47 = vector.load %arg3[%c5_35, %c0_36, %c0_37] : memref<6x1x128xf32, #tpu.memory_space<vmem>>, vector<1x1x128xf32>
    %48 = vector.shape_cast %47 : vector<1x1x128xf32> to vector<1x128xf32>
    %49 = vector.broadcast %48 : vector<1x128xf32> to vector<256x128xf32>
    %50 = arith.addf %46, %49 : vector<256x128xf32>
    %c1_i32 = arith.constant 1 : i32
    %51 = tpu.dynamic_rotate %2 by %c1_i32 dim 1 : vector<256x128xf32>, i32 -> vector<256x128xf32>
    %52 = arith.addf %50, %51 : vector<256x128xf32>
    %c0_38 = arith.constant 0 : index
    %c0_39 = arith.constant 0 : index
    %53 = vector.load %arg4[%c0_38, %c0_39] : memref<256x128xf32, #tpu.memory_space<vmem>>, vector<256x128xf32>
    tpu.vector_store %arg4[%c0_38, %c0_39], %52 {strides = array<i32>} : memref<256x128xf32, #tpu.memory_space<vmem>>, vector<256x128xf32>,
    return
  }
  func.func @transform_0(%arg0: i32) -> (i32, i32) {
    %c0_i32 = arith.constant 0 : i32
    %c0_i32_0 = arith.constant 0 : i32
    return %arg0, %c0_i32 : i32, i32
  }
  func.func @transform_1(%arg0: i32) -> (i32, i32, i32) {
    %c0_i32 = arith.constant 0 : i32
    %c0_i32_0 = arith.constant 0 : i32
    %c0_i32_1 = arith.constant 0 : i32
    %c0_i32_2 = arith.constant 0 : i32
    return %c0_i32, %c0_i32_0, %c0_i32_1 : i32, i32, i32
  }
  func.func @transform_2(%arg0: i32) -> (i32, i32, i32) {
    %c0_i32 = arith.constant 0 : i32
    %c0_i32_0 = arith.constant 0 : i32
    %c0_i32_1 = arith.constant 0 : i32
    %c0_i32_2 = arith.constant 0 : i32
    return %c0_i32, %c0_i32_0, %c0_i32_1 : i32, i32, i32
  }
  func.func @transform_3(%arg0: i32) -> (i32, i32) {
    %c0_i32 = arith.constant 0 : i32
    %c0_i32_0 = arith.constant 0 : i32
    return %arg0, %c0_i32 : i32, i32
  }
}

</mosaic_0001>

<llo_original>
// kernel: tpu_custom_call.1
$region0: #{tpu_custom_call.1}
  #allocation0 [shape = 'u32[]', space=smem, size = 0x4, offset = 0x4, fixed_abs, tag = 'smem constant byte address 0x4 - core index']
  #allocation1 [shape = 'u32[144,128]{1,0:T(1,128)}', space=vmem, size = 0x12000, scoped, tag = 'internal scratch']
  %s0 = inlined_call_operand.vmem [shape: f32[512,4], index: 0, kind: input, shape index: {}]
  %s1 = inlined_call_operand.hbm [shape: f32[6,128,128], index: 1, kind: input, shape index: {}]
  %s2 = inlined_call_operand.vmem [shape: f32[6,1,128], index: 2, kind: input, shape index: {}]
  %s3 = inlined_call_operand.hbm [shape: f32[512,128], index: 3, kind: output, shape index: {}]
  %s4 = sld [smem:[#allocation0]]
  $region49: #{tpu_custom_call.1} parent=0
    _
  %s6 = ssub.s32 1, %s4
  %s7 = scalar_select 0, %s6, %s4
  $region1: #{tpu_custom_call.1} parent=0
    #allocation2 [shape = 'u8[393216]{0}', space=vmem, size = 0x60000, scoped, tag = 'input window, operand 1, single buffered']
    #allocation3 [shape = 's32[2]{0}', space=sflag, size = 0x8, scoped, tag = 'scoped memory for tpu_custom_call.1']
    #allocation4 [shape = 's32[2]{0}', space=sflag, size = 0x8, scoped, tag = 'scoped memory for tpu_custom_call.1']
    #allocation5 [shape = 'u8[262144]{0}', space=vmem, size = 0x40000, scoped, tag = 'output window, operand 0']
    %8 = vsyncpa [#allocation3], 0
    %9 = vsyncpa [#allocation4], 0
    %s10 = scalar_lea.sflag [#allocation4], 1
    %11 = vsyncpa %s10, 0
    loop: start=0, step=1, limit=4
    $region2: #{tpu_custom_call.1} parent=1 // loop_pre_header
      _
    $region3: #{tpu_custom_call.1} parent=1 // loop_header
      %s13 = sphi 0, %s17
      %p14 = scmp.ge.s32.totalorder %s13, 4
      %s23 = sphi 0, %s25
      %s26 = sphi 0, %s23
      %s27 = sphi 0, %s26
      %s43 = sphi 0, %s27
      %s47 = sphi 0, %s47
      %s49 = sphi 0, %s47
      %s50 = sphi 0, %s49
      %s64 = sphi 0, %s50
      %s68 = sphi 0, %s68
      %s70 = sphi 0, %s68
      %s71 = sphi 0, %s70
      %s85 = sphi 0, %s71
      %s91 = sphi 0, %s93
      %s94 = sphi 0, %s91
      %s95 = sphi 0, %s94
      %s111 = sphi 0, %s95
    $region4: #{tpu_custom_call.1} parent=1 // loop_header_branch
      %16 = sbr.rel (%p14) target = $region8
    $region5: #{tpu_custom_call.1} parent=1 // loop_body
      %s18 = ssub.s32 %s13, 1
      %s19 = ssub.s32 %s13, 2
      %s20 = sadd.s32 %s13, 1
      %s21 = ssub.s32 %s13, %s20
      %p22 = scmp.eq.s32.totalorder %s21, 0
      %s24 = sadd.s32 %s23, 1
      %s25 = scalar_select %p22, %s23, %s24
      %p28 = pneg %p22
      %p29 = scmp.eq.s32.totalorder %s13, 1
      %p30 = por %p28, %p29
      %p31 = scmp.ne.s32.totalorder %s23, %s26
      %p32 = scmp.eq.s32.totalorder %s13, 0
      %p33 = por %p31, %p32
      %p34 = scmp.ne.s32.totalorder %s23, %s26
      %p35 = scmp.eq.s32.totalorder %s18, 1
      %p36 = por %p34, %p35
      %p37 = scmp.ne.s32.totalorder %s26, %s27
      %p38 = scmp.eq.s32.totalorder %s18, 0
      %p39 = por %p37, %p38
      %p40 = scmp.ne.s32.totalorder %s26, %s27
      %p41 = scmp.eq.s32.totalorder %s19, 1
      %p42 = por %p40, %p41
      %p44 = scmp.ne.s32.totalorder %s27, %s43
      %p45 = scmp.eq.s32.totalorder %s19, 0
      %p46 = por %p44, %p45
      %s48 = sadd.s32 %s47, 1
      %p51 = scmp.eq.s32.totalorder %s13, 1
      %p52 = scmp.ne.s32.totalorder %s47, %s49
      %p53 = scmp.eq.s32.totalorder %s13, 0
      %p54 = por %p52, %p53
      %p55 = scmp.ne.s32.totalorder %s47, %s49
      %p56 = scmp.eq.s32.totalorder %s18, 1
      %p57 = por %p55, %p56
      %p58 = scmp.ne.s32.totalorder %s49, %s50
      %p59 = scmp.eq.s32.totalorder %s18, 0
      %p60 = por %p58, %p59
      %p61 = scmp.ne.s32.totalorder %s49, %s50
      %p62 = scmp.eq.s32.totalorder %s19, 1
      %p63 = por %p61, %p62
      %p65 = scmp.ne.s32.totalorder %s50, %s64
      %p66 = scmp.eq.s32.totalorder %s19, 0
      %p67 = por %p65, %p66
      %s69 = sadd.s32 %s68, 1
      %p72 = scmp.eq.s32.totalorder %s13, 1
      %p73 = scmp.ne.s32.totalorder %s68, %s70
      %p74 = scmp.eq.s32.totalorder %s13, 0
      %p75 = por %p73, %p74
      %p76 = scmp.ne.s32.totalorder %s68, %s70
      %p77 = scmp.eq.s32.totalorder %s18, 1
      %p78 = por %p76, %p77
      %p79 = scmp.ne.s32.totalorder %s70, %s71
      %p80 = scmp.eq.s32.totalorder %s18, 0
      %p81 = por %p79, %p80
      %p82 = scmp.ne.s32.totalorder %s70, %s71
      %p83 = scmp.eq.s32.totalorder %s19, 1
      %p84 = por %p82, %p83
      %p86 = scmp.ne.s32.totalorder %s71, %s85
      %p87 = scmp.eq.s32.totalorder %s19, 0
      %p88 = por %p86, %p87
      %s89 = ssub.s32 %s13, %s20
      %p90 = scmp.eq.s32.totalorder %s89, 0
      %s92 = sadd.s32 %s91, 1
      %s93 = scalar_select %p90, %s91, %s92
      %p96 = pneg %p90
      %p97 = scmp.eq.s32.totalorder %s13, 1
      %p98 = por %p96, %p97
      %p99 = scmp.ne.s32.totalorder %s91, %s94
      %p100 = scmp.eq.s32.totalorder %s13, 0
      %p101 = por %p99, %p100
      %p102 = scmp.ne.s32.totalorder %s91, %s94
      %p103 = scmp.eq.s32.totalorder %s18, 1
      %p104 = por %p102, %p103
      %p105 = scmp.ne.s32.totalorder %s94, %s95
      %p106 = scmp.eq.s32.totalorder %s18, 0
      %p107 = por %p105, %p106
      %p108 = scmp.ne.s32.totalorder %s94, %s95
      %p109 = scmp.eq.s32.totalorder %s19, 1
      %p110 = por %p108, %p109
      %p112 = scmp.ne.s32.totalorder %s95, %s111
      %p113 = scmp.eq.s32.totalorder %s19, 0
      %p114 = por %p112, %p113
      %p115 = scmp.le.s32.totalorder 1, %s13
      %p116 = scmp.lt.s32.totalorder %s13, 3
      %p117 = pnand %p115, %p116
      %p118 = pneg %p117
      // Predicated region
      $region9: #{tpu_custom_call.1} parent=5 // pred_check
        _
      $region10: #{tpu_custom_call.1} parent=5 // pred_check_branch
        %120 = sbr.rel (%p117) target = $region12
      $region11: #{tpu_custom_call.1} parent=5 // pred_region
        %s121 = ssub.s32 %s13, 1
        // Predicated region
        $region13: #{tpu_custom_call.1} parent=11 // pred_check
          %p122 = pneg %p60
        $region14: #{tpu_custom_call.1} parent=11 // pred_check_branch
          %124 = sbr.rel (%p122) target = $region16
        $region15: #{tpu_custom_call.1} parent=11 // pred_region
          %s126 = ssub.s32 12288, 12288
          %127 = vsyncadd [#allocation3], %s126
          %s128 = sshll.u32 [#allocation2], 4
          %s129 = int_to_ptr.vmem [resolvable:$true] %s128
          %134 = dma.hbm_to_vmem [thread:$0]  %s1, 12288, %s129, [#allocation3], 128, 128, 8
        $region16: #{tpu_custom_call.1} parent=11 // pred_fallthru
          _
        // Predicated region
        $region17: #{tpu_custom_call.1} parent=11 // pred_check
          %p135 = pneg %p81
        $region18: #{tpu_custom_call.1} parent=11 // pred_check_branch
          %137 = sbr.rel (%p135) target = $region20
        $region19: #{tpu_custom_call.1} parent=11 // pred_region
          _
        $region20: #{tpu_custom_call.1} parent=11 // pred_fallthru
          _
      $region12: #{tpu_custom_call.1} parent=5 // pred_fallthru
        _
      %p138 = scmp.lt.s32.totalorder %s13, 2
      // Predicated region
      $region21: #{tpu_custom_call.1} parent=5 // pred_check
        %p139 = pneg %p138
      $region22: #{tpu_custom_call.1} parent=5 // pred_check_branch
        %141 = sbr.rel (%p139) target = $region24
      $region23: #{tpu_custom_call.1} parent=5 // pred_region
        // Predicated region
        $region25: #{tpu_custom_call.1} parent=23 // pred_check
          %p142 = pneg %p33
        $region26: #{tpu_custom_call.1} parent=23 // pred_check_branch
          %144 = sbr.rel (%p142) target = $region28
        $region27: #{tpu_custom_call.1} parent=23 // pred_region
          %s145 = smul.u32 32, %s13
          %p146 = scmp.lt.s32.totalorder %s145, 63
          %s147 = scalar_select %p146, %s145, 63
          %s148 = smul.addr %s147, 8
          %s149 = scalar_lea.vmem %s0, %s148
          %s150 = smul.u32 32, %s13
        $region28: #{tpu_custom_call.1} parent=23 // pred_fallthru
          _
      $region24: #{tpu_custom_call.1} parent=5 // pred_fallthru
        _
      %p151 = scmp.le.s32.totalorder 1, %s13
      %p152 = scmp.lt.s32.totalorder %s13, 3
      %p153 = pnand %p151, %p152
      %p154 = pneg %p153
      // Predicated region
      $region29: #{tpu_custom_call.1} parent=5 // pred_check
        _
      $region30: #{tpu_custom_call.1} parent=5 // pred_check_branch
        %156 = sbr.rel (%p153) target = $region32
      $region31: #{tpu_custom_call.1} parent=5 // pred_region
        %s157 = ssub.s32 %s13, 1
        // Predicated region
        $region33: #{tpu_custom_call.1} parent=31 // pred_check
          %p158 = pneg %p60
        $region34: #{tpu_custom_call.1} parent=31 // pred_check_branch
          %160 = sbr.rel (%p158) target = $region36
        $region35: #{tpu_custom_call.1} parent=31 // pred_region
          %161 = dma.done [#allocation3], 12288
        $region36: #{tpu_custom_call.1} parent=31 // pred_fallthru
          _
        %s162 = smul.u32 32, %s18
        %p163 = scmp.lt.s32.totalorder %s162, 63
        %s164 = scalar_select %p163, %s162, 63
        %s165 = smul.addr %s164, 8
        %s166 = scalar_lea.vmem %s0, %s165
        %p167 = pneg %p39
        %p168 = pneg %p36
        %p169 = pneg %p60
        %p170 = pneg %p57
        %p171 = pneg %p81
        %p172 = pneg %p78
        %p173 = pneg %p107
        %p174 = pneg %p104
        %s175 = sand.u32 %s94, 1
        %s176 = scalar_lea.sflag [#allocation4], %s175
        %s177 = sand.u32 %s94, 1
        %s178 = smul.addr %s177, 256
        %s179 = scalar_lea.vmem [#allocation5], %s178
        %s180 = smul.u32 32, %s18
        %p181 = scmp.lt.s32.totalorder %s180, 63
        %s182 = scalar_select %p181, %s180, 63
        %s183 = smul.addr %s182, 8
        %s184 = scalar_lea.vmem %s0, %s183
        %s185 = smul.u32 32, %s18
        %s186 = smul.u32 32, %s18
        %v187 = vld [vmem:[%s184] sm:$0xff]
        %v188 = vld [vmem:[%s184 + $0x8] sm:$0xff]
        %v189 = vld [vmem:[%s184 + $0x10] sm:$0xff]
        %v190 = vld [vmem:[%s184 + $0x18] sm:$0xff]
        %v191 = vld [vmem:[%s184 + $0x20] sm:$0xff]
        %v192 = vld [vmem:[%s184 + $0x28] sm:$0xff]
        %v193 = vld [vmem:[%s184 + $0x30] sm:$0xff]
        %v194 = vld [vmem:[%s184 + $0x38] sm:$0xff]
        %v195 = vld [vmem:[%s184 + $0x40] sm:$0xff]
        %v196 = vld [vmem:[%s184 + $0x48] sm:$0xff]
        %v197 = vld [vmem:[%s184 + $0x50] sm:$0xff]
        %v198 = vld [vmem:[%s184 + $0x58] sm:$0xff]
        %v199 = vld [vmem:[%s184 + $0x60] sm:$0xff]
        %v200 = vld [vmem:[%s184 + $0x68] sm:$0xff]
        %v201 = vld [vmem:[%s184 + $0x70] sm:$0xff]
        %v202 = vld [vmem:[%s184 + $0x78] sm:$0xff]
        %v203 = vld [vmem:[%s184 + $0x80] sm:$0xff]
        %v204 = vld [vmem:[%s184 + $0x88] sm:$0xff]
        %v205 = vld [vmem:[%s184 + $0x90] sm:$0xff]
        %v206 = vld [vmem:[%s184 + $0x98] sm:$0xff]
        %v207 = vld [vmem:[%s184 + $0xa0] sm:$0xff]
        %v208 = vld [vmem:[%s184 + $0xa8] sm:$0xff]
        %v209 = vld [vmem:[%s184 + $0xb0] sm:$0xff]
        %v210 = vld [vmem:[%s184 + $0xb8] sm:$0xff]
        %v211 = vld [vmem:[%s184 + $0xc0] sm:$0xff]
        %v212 = vld [vmem:[%s184 + $0xc8] sm:$0xff]
        %v213 = vld [vmem:[%s184 + $0xd0] sm:$0xff]
        %v214 = vld [vmem:[%s184 + $0xd8] sm:$0xff]
        %v215 = vld [vmem:[%s184 + $0xe0] sm:$0xff]
        %v216 = vld [vmem:[%s184 + $0xe8] sm:$0xff]
        %v217 = vld [vmem:[%s184 + $0xf0] sm:$0xff]
        %v218 = vld [vmem:[%s184 + $0xf8] sm:$0xff]
        %vm219 = vcmask 31744
        %v220 = vsel %vm219, %v187, 0.0
        %v221 = vsel %vm219, %v188, 0.0
        %v222 = vsel %vm219, %v189, 0.0
        %v223 = vsel %vm219, %v190, 0.0
        %v224 = vsel %vm219, %v191, 0.0
        %v225 = vsel %vm219, %v192, 0.0
        %v226 = vsel %vm219, %v193, 0.0
        %v227 = vsel %vm219, %v194, 0.0
        %v228 = vsel %vm219, %v195, 0.0
        %v229 = vsel %vm219, %v196, 0.0
        %v230 = vsel %vm219, %v197, 0.0
        %v231 = vsel %vm219, %v198, 0.0
        %v232 = vsel %vm219, %v199, 0.0
        %v233 = vsel %vm219, %v200, 0.0
        %v234 = vsel %vm219, %v201, 0.0
        %v235 = vsel %vm219, %v202, 0.0
        %v236 = vsel %vm219, %v203, 0.0
        %v237 = vsel %vm219, %v204, 0.0
        %v238 = vsel %vm219, %v205, 0.0
        %v239 = vsel %vm219, %v206, 0.0
        %v240 = vsel %vm219, %v207, 0.0
        %v241 = vsel %vm219, %v208, 0.0
        %v242 = vsel %vm219, %v209, 0.0
        %v243 = vsel %vm219, %v210, 0.0
        %v244 = vsel %vm219, %v211, 0.0
        %v245 = vsel %vm219, %v212, 0.0
        %v246 = vsel %vm219, %v213, 0.0
        %v247 = vsel %vm219, %v214, 0.0
        %v248 = vsel %vm219, %v215, 0.0
        %v249 = vsel %vm219, %v216, 0.0
        %v250 = vsel %vm219, %v217, 0.0
        %v251 = vsel %vm219, %v218, 0.0
        %v252 = vld [vmem:[#allocation2] sm:$0xff]
        %v253 = vld [vmem:[#allocation2 + $0x8] sm:$0xff]
        %v254 = vld [vmem:[#allocation2 + $0x10] sm:$0xff]
        %v255 = vld [vmem:[#allocation2 + $0x18] sm:$0xff]
        %v256 = vld [vmem:[#allocation2 + $0x20] sm:$0xff]
        %v257 = vld [vmem:[#allocation2 + $0x28] sm:$0xff]
        %v258 = vld [vmem:[#allocation2 + $0x30] sm:$0xff]
        %v259 = vld [vmem:[#allocation2 + $0x38] sm:$0xff]
        %v260 = vld [vmem:[#allocation2 + $0x40] sm:$0xff]
        %v261 = vld [vmem:[#allocation2 + $0x48] sm:$0xff]
        %v262 = vld [vmem:[#allocation2 + $0x50] sm:$0xff]
        %v263 = vld [vmem:[#allocation2 + $0x58] sm:$0xff]
        %v264 = vld [vmem:[#allocation2 + $0x60] sm:$0xff]
        %v265 = vld [vmem:[#allocation2 + $0x68] sm:$0xff]
        %v266 = vld [vmem:[#allocation2 + $0x70] sm:$0xff]
        %v267 = vld [vmem:[#allocation2 + $0x78] sm:$0xff]
        %v268 = vld [vmem:[%s2] sm:$0x1]
        %v270 = vlaneseq
        %v271 = vshrl.u32 %v270, 7
        %v272 = vsub.s32 0, %v271
        %v273 = vrot.slane %v268, %v272
        %275 = vmatprep.subr.mxu0 0.0
        %276 = vmatpush1.msra.mxu0 %v267
        %277 = vmatprep.subr.mxu0 0.0
        %278 = vmatpush1.msra.mxu0 %v266
        %279 = vmatprep.subr.mxu0 0.0
        %280 = vmatpush1.msra.mxu0 %v265
        %281 = vmatprep.subr.mxu0 0.0
        %282 = vmatpush1.msra.mxu0 %v264
        %283 = vmatprep.subr.mxu0 0.0
        %284 = vmatpush1.msra.mxu0 %v263
        %285 = vmatprep.subr.mxu0 0.0
        %286 = vmatpush1.msra.mxu0 %v262
        %287 = vmatprep.subr.mxu0 0.0
        %288 = vmatpush1.msra.mxu0 %v261
        %289 = vmatprep.subr.mxu0 0.0
        %290 = vmatpush1.msra.mxu0 %v260
        %291 = vmatprep.subr.mxu0 0.0
        %292 = vmatpush1.msra.mxu0 %v259
        %293 = vmatprep.subr.mxu0 0.0
        %294 = vmatpush1.msra.mxu0 %v258
        %295 = vmatprep.subr.mxu0 0.0
        %296 = vmatpush1.msra.mxu0 %v257
        %297 = vmatprep.subr.mxu0 0.0
        %298 = vmatpush1.msra.mxu0 %v256
        %299 = vmatprep.subr.mxu0 0.0
        %300 = vmatpush1.msra.mxu0 %v255
        %301 = vmatprep.subr.mxu0 0.0
        %302 = vmatpush1.msra.mxu0 %v254
        %303 = vmatprep.subr.mxu0 0.0
        %304 = vmatpush1.msra.mxu0 %v253
        %305 = vmatprep.subr.mxu0 0.0
        %306 = vmatpush1.msra.mxu0 %v252
        %307 = vmatprep.subr.mxu0 0.0
        %308 = vmatpush2.msra.mxu0 0.0
        %309 = vmatprep.subr.mxu0 0.0
        %310 = vmatpush2.msra.mxu0 0.0
        %311 = vmatprep.subr.mxu0 0.0
        %312 = vmatpush2.msra.mxu0 0.0
        %313 = vmatprep.subr.mxu0 0.0
        %314 = vmatpush2.msra.mxu0 0.0
        %315 = vmatprep.subr.mxu0 0.0
        %316 = vmatpush2.msra.mxu0 0.0
        %317 = vmatprep.subr.mxu0 0.0
        %318 = vmatpush2.msra.mxu0 0.0
        %319 = vmatprep.subr.mxu0 0.0
        %320 = vmatpush2.msra.mxu0 0.0
        %321 = vmatprep.subr.mxu0 0.0
        %322 = vmatpush2.msra.mxu0 0.0
        %323 = vmatprep.subr.mxu0 0.0
        %324 = vmatpush2.msra.mxu0 0.0
        %325 = vmatprep.subr.mxu0 0.0
        %326 = vmatpush2.msra.mxu0 0.0
        %327 = vmatprep.subr.mxu0 0.0
        %328 = vmatpush2.msra.mxu0 0.0
        %329 = vmatprep.subr.mxu0 0.0
        %330 = vmatpush2.msra.mxu0 0.0
        %331 = vmatprep.subr.mxu0 0.0
        %332 = vmatpush2.msra.mxu0 0.0
        %333 = vmatprep.subr.mxu0 0.0
        %334 = vmatpush2.msra.mxu0 0.0
        %335 = vmatprep.subr.mxu0 0.0
        %336 = vmatpush2.msra.mxu0 0.0
        %337 = vmatprep.subr.mxu0 0.0
        %338 = vmatpush2.msra.mxu0 0.0
        %339 = vmatprep.mubr.f32.mxu0 0.0
        %340 = vmatmul.mubr.f32.gmra.mxu0 %v220
        %v341 = vpop.f32.mrf.mxu0
        %v342 = vadd.f32 %v273, %v341
        %v343 = vpop.f32.mrf.mxu0
        %344 = vmatprep.mubr.f32.mxu0 0.0
        %345 = vmatmul.mubr.f32.gmra.mxu0 %v221
        %v346 = vpop.f32.mrf.mxu0
        %v347 = vadd.f32 %v273, %v346
        %v348 = vpop.f32.mrf.mxu0
        %349 = vmatprep.mubr.f32.mxu0 0.0
        %350 = vmatmul.mubr.f32.gmra.mxu0 %v222
        %v351 = vpop.f32.mrf.mxu0
        %v352 = vadd.f32 %v273, %v351
        %v353 = vpop.f32.mrf.mxu0
        %354 = vmatprep.mubr.f32.mxu0 0.0
        %355 = vmatmul.mubr.f32.gmra.mxu0 %v223
        %v356 = vpop.f32.mrf.mxu0
        %v357 = vadd.f32 %v273, %v356
        %v358 = vpop.f32.mrf.mxu0
        %359 = vmatprep.mubr.f32.mxu0 0.0
        %360 = vmatmul.mubr.f32.gmra.mxu0 %v224
        %v361 = vpop.f32.mrf.mxu0
        %v362 = vadd.f32 %v273, %v361
        %v363 = vpop.f32.mrf.mxu0
        %364 = vmatprep.mubr.f32.mxu0 0.0
        %365 = vmatmul.mubr.f32.gmra.mxu0 %v225
        %v366 = vpop.f32.mrf.mxu0
        %v367 = vadd.f32 %v273, %v366
        %v368 = vpop.f32.mrf.mxu0
        %369 = vmatprep.mubr.f32.mxu0 0.0
        %370 = vmatmul.mubr.f32.gmra.mxu0 %v226
        %v371 = vpop.f32.mrf.mxu0
        %v372 = vadd.f32 %v273, %v371
        %v373 = vpop.f32.mrf.mxu0
        %374 = vmatprep.mubr.f32.mxu0 0.0
        %375 = vmatmul.mubr.f32.gmra.mxu0 %v227
        %v376 = vpop.f32.mrf.mxu0
        %v377 = vadd.f32 %v273, %v376
        %v378 = vpop.f32.mrf.mxu0
        %379 = vmatprep.mubr.f32.mxu0 0.0
        %380 = vmatmul.mubr.f32.gmra.mxu0 %v228
        %v381 = vpop.f32.mrf.mxu0
        %v382 = vadd.f32 %v273, %v381
        %v383 = vpop.f32.mrf.mxu0
        %384 = vmatprep.mubr.f32.mxu0 0.0
        %385 = vmatmul.mubr.f32.gmra.mxu0 %v229
        %v386 = vpop.f32.mrf.mxu0
        %v387 = vadd.f32 %v273, %v386
        %v388 = vpop.f32.mrf.mxu0
        %389 = vmatprep.mubr.f32.mxu0 0.0
        %390 = vmatmul.mubr.f32.gmra.mxu0 %v230
        %v391 = vpop.f32.mrf.mxu0
        %v392 = vadd.f32 %v273, %v391
        %v393 = vpop.f32.mrf.mxu0
        %394 = vmatprep.mubr.f32.mxu0 0.0
        %395 = vmatmul.mubr.f32.gmra.mxu0 %v231
        %v396 = vpop.f32.mrf.mxu0
        %v397 = vadd.f32 %v273, %v396
        %v398 = vpop.f32.mrf.mxu0
        %399 = vmatprep.mubr.f32.mxu0 0.0
        %400 = vmatmul.mubr.f32.gmra.mxu0 %v232
        %v401 = vpop.f32.mrf.mxu0
        %v402 = vadd.f32 %v273, %v401
        %v403 = vpop.f32.mrf.mxu0
        %404 = vmatprep.mubr.f32.mxu0 0.0
        %405 = vmatmul.mubr.f32.gmra.mxu0 %v233
        %v406 = vpop.f32.mrf.mxu0
        %v407 = vadd.f32 %v273, %v406
        %v408 = vpop.f32.mrf.mxu0
        %409 = vmatprep.mubr.f32.mxu0 0.0
        %410 = vmatmul.mubr.f32.gmra.mxu0 %v234
        %v411 = vpop.f32.mrf.mxu0
        %v412 = vadd.f32 %v273, %v411
        %v413 = vpop.f32.mrf.mxu0
        %414 = vmatprep.mubr.f32.mxu0 0.0
        %415 = vmatmul.mubr.f32.gmra.mxu0 %v235
        %v416 = vpop.f32.mrf.mxu0
        %v417 = vadd.f32 %v273, %v416
        %v418 = vpop.f32.mrf.mxu0
        %419 = vmatprep.mubr.f32.mxu0 0.0
        %420 = vmatmul.mubr.f32.gmra.mxu0 %v236
        %v421 = vpop.f32.mrf.mxu0
        %v422 = vadd.f32 %v273, %v421
        %v423 = vpop.f32.mrf.mxu0
        %424 = vmatprep.mubr.f32.mxu0 0.0
        %425 = vmatmul.mubr.f32.gmra.mxu0 %v237
        %v426 = vpop.f32.mrf.mxu0
        %v427 = vadd.f32 %v273, %v426
        %v428 = vpop.f32.mrf.mxu0
        %429 = vmatprep.mubr.f32.mxu0 0.0
        %430 = vmatmul.mubr.f32.gmra.mxu0 %v238
        %v431 = vpop.f32.mrf.mxu0
        %v432 = vadd.f32 %v273, %v431
        %v433 = vpop.f32.mrf.mxu0
        %434 = vmatprep.mubr.f32.mxu0 0.0
        %435 = vmatmul.mubr.f32.gmra.mxu0 %v239
        %v436 = vpop.f32.mrf.mxu0
        %v437 = vadd.f32 %v273, %v436
        %v438 = vpop.f32.mrf.mxu0
        %439 = vmatprep.mubr.f32.mxu0 0.0
        %440 = vmatmul.mubr.f32.gmra.mxu0 %v240
        %v441 = vpop.f32.mrf.mxu0
        %v442 = vadd.f32 %v273, %v441
        %v443 = vpop.f32.mrf.mxu0
        %444 = vmatprep.mubr.f32.mxu0 0.0
        %445 = vmatmul.mubr.f32.gmra.mxu0 %v241
        %v446 = vpop.f32.mrf.mxu0
        %v447 = vadd.f32 %v273, %v446
        %v448 = vpop.f32.mrf.mxu0
        %449 = vmatprep.mubr.f32.mxu0 0.0
        %450 = vmatmul.mubr.f32.gmra.mxu0 %v242
        %v451 = vpop.f32.mrf.mxu0
        %v452 = vadd.f32 %v273, %v451
        %v453 = vpop.f32.mrf.mxu0
        %454 = vmatprep.mubr.f32.mxu0 0.0
        %455 = vmatmul.mubr.f32.gmra.mxu0 %v243
        %v456 = vpop.f32.mrf.mxu0
        %v457 = vadd.f32 %v273, %v456
        %v458 = vpop.f32.mrf.mxu0
        %459 = vmatprep.mubr.f32.mxu0 0.0
        %460 = vmatmul.mubr.f32.gmra.mxu0 %v244
        %v461 = vpop.f32.mrf.mxu0
        %v462 = vadd.f32 %v273, %v461
        %v463 = vpop.f32.mrf.mxu0
        %464 = vmatprep.mubr.f32.mxu0 0.0
        %465 = vmatmul.mubr.f32.gmra.mxu0 %v245
        %v466 = vpop.f32.mrf.mxu0
        %v467 = vadd.f32 %v273, %v466
        %v468 = vpop.f32.mrf.mxu0
        %469 = vmatprep.mubr.f32.mxu0 0.0
        %470 = vmatmul.mubr.f32.gmra.mxu0 %v246
        %v471 = vpop.f32.mrf.mxu0
        %v472 = vadd.f32 %v273, %v471
        %v473 = vpop.f32.mrf.mxu0
        %474 = vmatprep.mubr.f32.mxu0 0.0
        %475 = vmatmul.mubr.f32.gmra.mxu0 %v247
        %v476 = vpop.f32.mrf.mxu0
        %v477 = vadd.f32 %v273, %v476
        %v478 = vpop.f32.mrf.mxu0
        %479 = vmatprep.mubr.f32.mxu0 0.0
        %480 = vmatmul.mubr.f32.gmra.mxu0 %v248
        %v481 = vpop.f32.mrf.mxu0
        %v482 = vadd.f32 %v273, %v481
        %v483 = vpop.f32.mrf.mxu0
        %484 = vmatprep.mubr.f32.mxu0 0.0
        %485 = vmatmul.mubr.f32.gmra.mxu0 %v249
        %v486 = vpop.f32.mrf.mxu0
        %v487 = vadd.f32 %v273, %v486
        %v488 = vpop.f32.mrf.mxu0
        %489 = vmatprep.mubr.f32.mxu0 0.0
        %490 = vmatmul.mubr.f32.gmra.mxu0 %v250
        %v491 = vpop.f32.mrf.mxu0
        %v492 = vadd.f32 %v273, %v491
        %v493 = vpop.f32.mrf.mxu0
        %494 = vmatprep.mubr.f32.mxu0 0.0
        %495 = vmatmul.mubr.f32.gmra.mxu0 %v251
        %v496 = vpop.f32.mrf.mxu0
        %v497 = vadd.f32 %v273, %v496
        %v498 = vpop.f32.mrf.mxu0
        %499 = vdwg.mxu0
        %s500 = scalar_lea.vmem [#allocation2], 128
        %v501 = vld [vmem:[%s500] sm:$0xff]
        %v502 = vld [vmem:[%s500 + $0x8] sm:$0xff]
        %v503 = vld [vmem:[%s500 + $0x10] sm:$0xff]
        %v504 = vld [vmem:[%s500 + $0x18] sm:$0xff]
        %v505 = vld [vmem:[%s500 + $0x20] sm:$0xff]
        %v506 = vld [vmem:[%s500 + $0x28] sm:$0xff]
        %v507 = vld [vmem:[%s500 + $0x30] sm:$0xff]
        %v508 = vld [vmem:[%s500 + $0x38] sm:$0xff]
        %v509 = vld [vmem:[%s500 + $0x40] sm:$0xff]
        %v510 = vld [vmem:[%s500 + $0x48] sm:$0xff]
        %v511 = vld [vmem:[%s500 + $0x50] sm:$0xff]
        %v512 = vld [vmem:[%s500 + $0x58] sm:$0xff]
        %v513 = vld [vmem:[%s500 + $0x60] sm:$0xff]
        %v514 = vld [vmem:[%s500 + $0x68] sm:$0xff]
        %v515 = vld [vmem:[%s500 + $0x70] sm:$0xff]
        %v516 = vld [vmem:[%s500 + $0x78] sm:$0xff]
        %s517 = scalar_lea.vmem %s2, 1
        %v518 = vld [vmem:[%s517] sm:$0x1]
        %v520 = vlaneseq
        %v521 = vshrl.u32 %v520, 7
        %v522 = vsub.s32 0, %v521
        %v523 = vrot.slane %v518, %v522
        %525 = vmatprep.subr.mxu0 0.0
        %526 = vmatpush1.msra.mxu0 %v516
        %527 = vmatprep.subr.mxu0 0.0
        %528 = vmatpush1.msra.mxu0 %v515
        %529 = vmatprep.subr.mxu0 0.0
        %530 = vmatpush1.msra.mxu0 %v514
        %531 = vmatprep.subr.mxu0 0.0
        %532 = vmatpush1.msra.mxu0 %v513
        %533 = vmatprep.subr.mxu0 0.0
        %534 = vmatpush1.msra.mxu0 %v512
        %535 = vmatprep.subr.mxu0 0.0
        %536 = vmatpush1.msra.mxu0 %v511
        %537 = vmatprep.subr.mxu0 0.0
        %538 = vmatpush1.msra.mxu0 %v510
        %539 = vmatprep.subr.mxu0 0.0
        %540 = vmatpush1.msra.mxu0 %v509
        %541 = vmatprep.subr.mxu0 0.0
        %542 = vmatpush1.msra.mxu0 %v508
        %543 = vmatprep.subr.mxu0 0.0
        %544 = vmatpush1.msra.mxu0 %v507
        %545 = vmatprep.subr.mxu0 0.0
        %546 = vmatpush1.msra.mxu0 %v506
        %547 = vmatprep.subr.mxu0 0.0
        %548 = vmatpush1.msra.mxu0 %v505
        %549 = vmatprep.subr.mxu0 0.0
        %550 = vmatpush1.msra.mxu0 %v504
        %551 = vmatprep.subr.mxu0 0.0
        %552 = vmatpush1.msra.mxu0 %v503
        %553 = vmatprep.subr.mxu0 0.0
        %554 = vmatpush1.msra.mxu0 %v502
        %555 = vmatprep.subr.mxu0 0.0
        %556 = vmatpush1.msra.mxu0 %v501
        %557 = vmatprep.subr.mxu0 0.0
        %558 = vmatpush2.msra.mxu0 0.0
        %559 = vmatprep.subr.mxu0 0.0
        %560 = vmatpush2.msra.mxu0 0.0
        %561 = vmatprep.subr.mxu0 0.0
        %562 = vmatpush2.msra.mxu0 0.0
        %563 = vmatprep.subr.mxu0 0.0
        %564 = vmatpush2.msra.mxu0 0.0
        %565 = vmatprep.subr.mxu0 0.0
        %566 = vmatpush2.msra.mxu0 0.0
        %567 = vmatprep.subr.mxu0 0.0
        %568 = vmatpush2.msra.mxu0 0.0
        %569 = vmatprep.subr.mxu0 0.0
        %570 = vmatpush2.msra.mxu0 0.0
        %571 = vmatprep.subr.mxu0 0.0
        %572 = vmatpush2.msra.mxu0 0.0
        %573 = vmatprep.subr.mxu0 0.0
        %574 = vmatpush2.msra.mxu0 0.0
        %575 = vmatprep.subr.mxu0 0.0
        %576 = vmatpush2.msra.mxu0 0.0
        %577 = vmatprep.subr.mxu0 0.0
        %578 = vmatpush2.msra.mxu0 0.0
        %579 = vmatprep.subr.mxu0 0.0
        %580 = vmatpush2.msra.mxu0 0.0
        %581 = vmatprep.subr.mxu0 0.0
        %582 = vmatpush2.msra.mxu0 0.0
        %583 = vmatprep.subr.mxu0 0.0
        %584 = vmatpush2.msra.mxu0 0.0
        %585 = vmatprep.subr.mxu0 0.0
        %586 = vmatpush2.msra.mxu0 0.0
        %587 = vmatprep.subr.mxu0 0.0
        %588 = vmatpush2.msra.mxu0 0.0
        %589 = vmatprep.mubr.f32.mxu0 0.0
        %590 = vmatmul.mubr.f32.gmra.mxu0 %v220
        %v591 = vpop.f32.mrf.mxu0
        %v592 = vadd.f32 %v523, %v591
        %v593 = vpop.f32.mrf.mxu0
        %594 = vmatprep.mubr.f32.mxu0 0.0
        %595 = vmatmul.mubr.f32.gmra.mxu0 %v221
        %v596 = vpop.f32.mrf.mxu0
        %v597 = vadd.f32 %v523, %v596
        %v598 = vpop.f32.mrf.mxu0
        %599 = vmatprep.mubr.f32.mxu0 0.0
        %600 = vmatmul.mubr.f32.gmra.mxu0 %v222
        %v601 = vpop.f32.mrf.mxu0
        %v602 = vadd.f32 %v523, %v601
        %v603 = vpop.f32.mrf.mxu0
        %604 = vmatprep.mubr.f32.mxu0 0.0
        %605 = vmatmul.mubr.f32.gmra.mxu0 %v223
        %v606 = vpop.f32.mrf.mxu0
        %v607 = vadd.f32 %v523, %v606
        %v608 = vpop.f32.mrf.mxu0
        %609 = vmatprep.mubr.f32.mxu0 0.0
        %610 = vmatmul.mubr.f32.gmra.mxu0 %v224
        %v611 = vpop.f32.mrf.mxu0
        %v612 = vadd.f32 %v523, %v611
        %v613 = vpop.f32.mrf.mxu0
        %614 = vmatprep.mubr.f32.mxu0 0.0
        %615 = vmatmul.mubr.f32.gmra.mxu0 %v225
        %v616 = vpop.f32.mrf.mxu0
        %v617 = vadd.f32 %v523, %v616
        %v618 = vpop.f32.mrf.mxu0
        %619 = vmatprep.mubr.f32.mxu0 0.0
        %620 = vmatmul.mubr.f32.gmra.mxu0 %v226
        %v621 = vpop.f32.mrf.mxu0
        %v622 = vadd.f32 %v523, %v621
        %v623 = vpop.f32.mrf.mxu0
        %624 = vmatprep.mubr.f32.mxu0 0.0
        %625 = vmatmul.mubr.f32.gmra.mxu0 %v227
        %v626 = vpop.f32.mrf.mxu0
        %v627 = vadd.f32 %v523, %v626
        %v628 = vpop.f32.mrf.mxu0
        %629 = vmatprep.mubr.f32.mxu0 0.0
        %630 = vmatmul.mubr.f32.gmra.mxu0 %v228
        %v631 = vpop.f32.mrf.mxu0
        %v632 = vadd.f32 %v523, %v631
        %v633 = vpop.f32.mrf.mxu0
        %634 = vmatprep.mubr.f32.mxu0 0.0
        %635 = vmatmul.mubr.f32.gmra.mxu0 %v229
        %v636 = vpop.f32.mrf.mxu0
        %v637 = vadd.f32 %v523, %v636
        %v638 = vpop.f32.mrf.mxu0
        %639 = vmatprep.mubr.f32.mxu0 0.0
        %640 = vmatmul.mubr.f32.gmra.mxu0 %v230
        %v641 = vpop.f32.mrf.mxu0
        %v642 = vadd.f32 %v523, %v641
        %v643 = vpop.f32.mrf.mxu0
        %644 = vmatprep.mubr.f32.mxu0 0.0
        %645 = vmatmul.mubr.f32.gmra.mxu0 %v231
        %v646 = vpop.f32.mrf.mxu0
        %v647 = vadd.f32 %v523, %v646
        %v648 = vpop.f32.mrf.mxu0
        %649 = vmatprep.mubr.f32.mxu0 0.0
        %650 = vmatmul.mubr.f32.gmra.mxu0 %v232
        %v651 = vpop.f32.mrf.mxu0
        %v652 = vadd.f32 %v523, %v651
        %v653 = vpop.f32.mrf.mxu0
        %654 = vmatprep.mubr.f32.mxu0 0.0
        %655 = vmatmul.mubr.f32.gmra.mxu0 %v233
        %v656 = vpop.f32.mrf.mxu0
        %v657 = vadd.f32 %v523, %v656
        %v658 = vpop.f32.mrf.mxu0
        %659 = vmatprep.mubr.f32.mxu0 0.0
        %660 = vmatmul.mubr.f32.gmra.mxu0 %v234
        %v661 = vpop.f32.mrf.mxu0
        %v662 = vadd.f32 %v523, %v661
        %v663 = vpop.f32.mrf.mxu0
        %664 = vmatprep.mubr.f32.mxu0 0.0
        %665 = vmatmul.mubr.f32.gmra.mxu0 %v235
        %v666 = vpop.f32.mrf.mxu0
        %v667 = vadd.f32 %v523, %v666
        %v668 = vpop.f32.mrf.mxu0
        %669 = vmatprep.mubr.f32.mxu0 0.0
        %670 = vmatmul.mubr.f32.gmra.mxu0 %v236
        %v671 = vpop.f32.mrf.mxu0
        %v672 = vadd.f32 %v523, %v671
        %v673 = vpop.f32.mrf.mxu0
        %674 = vmatprep.mubr.f32.mxu0 0.0
        %675 = vmatmul.mubr.f32.gmra.mxu0 %v237
        %v676 = vpop.f32.mrf.mxu0
        %v677 = vadd.f32 %v523, %v676
        %v678 = vpop.f32.mrf.mxu0
        %679 = vmatprep.mubr.f32.mxu0 0.0
        %680 = vmatmul.mubr.f32.gmra.mxu0 %v238
        %v681 = vpop.f32.mrf.mxu0
        %v682 = vadd.f32 %v523, %v681
        %v683 = vpop.f32.mrf.mxu0
        %684 = vmatprep.mubr.f32.mxu0 0.0
        %685 = vmatmul.mubr.f32.gmra.mxu0 %v239
        %v686 = vpop.f32.mrf.mxu0
        %v687 = vadd.f32 %v523, %v686
        %v688 = vpop.f32.mrf.mxu0
        %689 = vmatprep.mubr.f32.mxu0 0.0
        %690 = vmatmul.mubr.f32.gmra.mxu0 %v240
        %v691 = vpop.f32.mrf.mxu0
        %v692 = vadd.f32 %v523, %v691
        %v693 = vpop.f32.mrf.mxu0
        %694 = vmatprep.mubr.f32.mxu0 0.0
        %695 = vmatmul.mubr.f32.gmra.mxu0 %v241
        %v696 = vpop.f32.mrf.mxu0
        %v697 = vadd.f32 %v523, %v696
        %v698 = vpop.f32.mrf.mxu0
        %699 = vmatprep.mubr.f32.mxu0 0.0
        %700 = vmatmul.mubr.f32.gmra.mxu0 %v242
        %v701 = vpop.f32.mrf.mxu0
        %v702 = vadd.f32 %v523, %v701
        %v703 = vpop.f32.mrf.mxu0
        %704 = vmatprep.mubr.f32.mxu0 0.0
        %705 = vmatmul.mubr.f32.gmra.mxu0 %v243
        %v706 = vpop.f32.mrf.mxu0
        %v707 = vadd.f32 %v523, %v706
        %v708 = vpop.f32.mrf.mxu0
        %709 = vmatprep.mubr.f32.mxu0 0.0
        %710 = vmatmul.mubr.f32.gmra.mxu0 %v244
        %v711 = vpop.f32.mrf.mxu0
        %v712 = vadd.f32 %v523, %v711
        %v713 = vpop.f32.mrf.mxu0
        %714 = vmatprep.mubr.f32.mxu0 0.0
        %715 = vmatmul.mubr.f32.gmra.mxu0 %v245
        %v716 = vpop.f32.mrf.mxu0
        %v717 = vadd.f32 %v523, %v716
        %v718 = vpop.f32.mrf.mxu0
        %719 = vmatprep.mubr.f32.mxu0 0.0
        %720 = vmatmul.mubr.f32.gmra.mxu0 %v246
        %v721 = vpop.f32.mrf.mxu0
        %v722 = vadd.f32 %v523, %v721
        %v723 = vpop.f32.mrf.mxu0
        %724 = vmatprep.mubr.f32.mxu0 0.0
        %725 = vmatmul.mubr.f32.gmra.mxu0 %v247
        %v726 = vpop.f32.mrf.mxu0
        %v727 = vadd.f32 %v523, %v726
        %v728 = vpop.f32.mrf.mxu0
        %729 = vmatprep.mubr.f32.mxu0 0.0
        %730 = vmatmul.mubr.f32.gmra.mxu0 %v248
        %v731 = vpop.f32.mrf.mxu0
        %v732 = vadd.f32 %v523, %v731
        %v733 = vpop.f32.mrf.mxu0
        %734 = vmatprep.mubr.f32.mxu0 0.0
        %735 = vmatmul.mubr.f32.gmra.mxu0 %v249
        %v736 = vpop.f32.mrf.mxu0
        %v737 = vadd.f32 %v523, %v736
        %v738 = vpop.f32.mrf.mxu0
        %739 = vmatprep.mubr.f32.mxu0 0.0
        %740 = vmatmul.mubr.f32.gmra.mxu0 %v250
        %v741 = vpop.f32.mrf.mxu0
        %v742 = vadd.f32 %v523, %v741
        %v743 = vpop.f32.mrf.mxu0
        %744 = vmatprep.mubr.f32.mxu0 0.0
        %745 = vmatmul.mubr.f32.gmra.mxu0 %v251
        %v746 = vpop.f32.mrf.mxu0
        %v747 = vadd.f32 %v523, %v746
        %v748 = vpop.f32.mrf.mxu0
        %749 = vdwg.mxu0
        %v750 = vtanh.pop %v342
        %v751 = vtanh.pop %v347
        %v752 = vtanh.pop %v352
        %v753 = vtanh.pop %v357
        %v754 = vtanh.pop %v362
        %v755 = vtanh.pop %v367
        %v756 = vtanh.pop %v372
        %v757 = vtanh.pop %v377
        %v758 = vtanh.pop %v382
        %v759 = vtanh.pop %v387
        %v760 = vtanh.pop %v392
        %v761 = vtanh.pop %v397
        %v762 = vtanh.pop %v402
        %v763 = vtanh.pop %v407
        %v764 = vtanh.pop %v412
        %v765 = vtanh.pop %v417
        %v766 = vtanh.pop %v422
        %v767 = vtanh.pop %v427
        %v768 = vtanh.pop %v432
        %v769 = vtanh.pop %v437
        %v770 = vtanh.pop %v442
        %v771 = vtanh.pop %v447
        %v772 = vtanh.pop %v452
        %v773 = vtanh.pop %v457
        %v774 = vtanh.pop %v462
        %v775 = vtanh.pop %v467
        %v776 = vtanh.pop %v472
        %v777 = vtanh.pop %v477
        %v778 = vtanh.pop %v482
        %v779 = vtanh.pop %v487
        %v780 = vtanh.pop %v492
        %v781 = vtanh.pop %v497
        %s782 = scalar_lea.vmem [#allocation2], 256
        %v783 = vld [vmem:[%s782] sm:$0xff]
        %v784 = vld [vmem:[%s782 + $0x8] sm:$0xff]
        %v785 = vld [vmem:[%s782 + $0x10] sm:$0xff]
        %v786 = vld [vmem:[%s782 + $0x18] sm:$0xff]
        %v787 = vld [vmem:[%s782 + $0x20] sm:$0xff]
        %v788 = vld [vmem:[%s782 + $0x28] sm:$0xff]
        %v789 = vld [vmem:[%s782 + $0x30] sm:$0xff]
        %v790 = vld [vmem:[%s782 + $0x38] sm:$0xff]
        %v791 = vld [vmem:[%s782 + $0x40] sm:$0xff]
        %v792 = vld [vmem:[%s782 + $0x48] sm:$0xff]
        %v793 = vld [vmem:[%s782 + $0x50] sm:$0xff]
        %v794 = vld [vmem:[%s782 + $0x58] sm:$0xff]
        %v795 = vld [vmem:[%s782 + $0x60] sm:$0xff]
        %v796 = vld [vmem:[%s782 + $0x68] sm:$0xff]
        %v797 = vld [vmem:[%s782 + $0x70] sm:$0xff]
        %v798 = vld [vmem:[%s782 + $0x78] sm:$0xff]
        %s799 = scalar_lea.vmem %s2, 2
        %v800 = vld [vmem:[%s799] sm:$0x1]
        %v802 = vlaneseq
        %v803 = vshrl.u32 %v802, 7
        %v804 = vsub.s32 0, %v803
        %v805 = vrot.slane %v800, %v804
        %807 = vmatprep.subr.mxu0 0.0
        %808 = vmatpush1.msra.mxu0 %v798
        %809 = vmatprep.subr.mxu0 0.0
        %810 = vmatpush1.msra.mxu0 %v797
        %811 = vmatprep.subr.mxu0 0.0
        %812 = vmatpush1.msra.mxu0 %v796
        %813 = vmatprep.subr.mxu0 0.0
        %814 = vmatpush1.msra.mxu0 %v795
        %815 = vmatprep.subr.mxu0 0.0
        %816 = vmatpush1.msra.mxu0 %v794
        %817 = vmatprep.subr.mxu0 0.0
        %818 = vmatpush1.msra.mxu0 %v793
        %819 = vmatprep.subr.mxu0 0.0
        %820 = vmatpush1.msra.mxu0 %v792
        %821 = vmatprep.subr.mxu0 0.0
        %822 = vmatpush1.msra.mxu0 %v791
        %823 = vmatprep.subr.mxu0 0.0
        %824 = vmatpush1.msra.mxu0 %v790
        %825 = vmatprep.subr.mxu0 0.0
        %826 = vmatpush1.msra.mxu0 %v789
        %827 = vmatprep.subr.mxu0 0.0
        %828 = vmatpush1.msra.mxu0 %v788
        %829 = vmatprep.subr.mxu0 0.0
        %830 = vmatpush1.msra.mxu0 %v787
        %831 = vmatprep.subr.mxu0 0.0
        %832 = vmatpush1.msra.mxu0 %v786
        %833 = vmatprep.subr.mxu0 0.0
        %834 = vmatpush1.msra.mxu0 %v785
        %835 = vmatprep.subr.mxu0 0.0
        %836 = vmatpush1.msra.mxu0 %v784
        %837 = vmatprep.subr.mxu0 0.0
        %838 = vmatpush1.msra.mxu0 %v783
        %839 = vmatprep.subr.mxu0 0.0
        %840 = vmatpush2.msra.mxu0 0.0
        %841 = vmatprep.subr.mxu0 0.0
        %842 = vmatpush2.msra.mxu0 0.0
        %843 = vmatprep.subr.mxu0 0.0
        %844 = vmatpush2.msra.mxu0 0.0
        %845 = vmatprep.subr.mxu0 0.0
        %846 = vmatpush2.msra.mxu0 0.0
        %847 = vmatprep.subr.mxu0 0.0
        %848 = vmatpush2.msra.mxu0 0.0
        %849 = vmatprep.subr.mxu0 0.0
        %850 = vmatpush2.msra.mxu0 0.0
        %851 = vmatprep.subr.mxu0 0.0
        %852 = vmatpush2.msra.mxu0 0.0
        %853 = vmatprep.subr.mxu0 0.0
        %854 = vmatpush2.msra.mxu0 0.0
        %855 = vmatprep.subr.mxu0 0.0
        %856 = vmatpush2.msra.mxu0 0.0
        %857 = vmatprep.subr.mxu0 0.0
        %858 = vmatpush2.msra.mxu0 0.0
        %859 = vmatprep.subr.mxu0 0.0
        %860 = vmatpush2.msra.mxu0 0.0
        %861 = vmatprep.subr.mxu0 0.0
        %862 = vmatpush2.msra.mxu0 0.0
        %863 = vmatprep.subr.mxu0 0.0
        %864 = vmatpush2.msra.mxu0 0.0
        %865 = vmatprep.subr.mxu0 0.0
        %866 = vmatpush2.msra.mxu0 0.0
        %867 = vmatprep.subr.mxu0 0.0
        %868 = vmatpush2.msra.mxu0 0.0
        %869 = vmatprep.subr.mxu0 0.0
        %870 = vmatpush2.msra.mxu0 0.0
        %871 = vmatprep.mubr.f32.mxu0 0.0
        %872 = vmatmul.mubr.f32.gmra.mxu0 %v750
        %v873 = vpop.f32.mrf.mxu0
        %v874 = vadd.f32 %v805, %v873
        %v875 = vpop.f32.mrf.mxu0
        %876 = vmatprep.mubr.f32.mxu0 0.0
        %877 = vmatmul.mubr.f32.gmra.mxu0 %v751
        %v878 = vpop.f32.mrf.mxu0
        %v879 = vadd.f32 %v805, %v878
        %v880 = vpop.f32.mrf.mxu0
        %881 = vmatprep.mubr.f32.mxu0 0.0
        %882 = vmatmul.mubr.f32.gmra.mxu0 %v752
        %v883 = vpop.f32.mrf.mxu0
        %v884 = vadd.f32 %v805, %v883
        %v885 = vpop.f32.mrf.mxu0
        %886 = vmatprep.mubr.f32.mxu0 0.0
        %887 = vmatmul.mubr.f32.gmra.mxu0 %v753
        %v888 = vpop.f32.mrf.mxu0
        %v889 = vadd.f32 %v805, %v888
        %v890 = vpop.f32.mrf.mxu0
        %891 = vmatprep.mubr.f32.mxu0 0.0
        %892 = vmatmul.mubr.f32.gmra.mxu0 %v754
        %v893 = vpop.f32.mrf.mxu0
        %v894 = vadd.f32 %v805, %v893
        %v895 = vpop.f32.mrf.mxu0
        %896 = vmatprep.mubr.f32.mxu0 0.0
        %897 = vmatmul.mubr.f32.gmra.mxu0 %v755
        %v898 = vpop.f32.mrf.mxu0
        %v899 = vadd.f32 %v805, %v898
        %v900 = vpop.f32.mrf.mxu0
        %901 = vmatprep.mubr.f32.mxu0 0.0
        %902 = vmatmul.mubr.f32.gmra.mxu0 %v756
        %v903 = vpop.f32.mrf.mxu0
        %v904 = vadd.f32 %v805, %v903
        %v905 = vpop.f32.mrf.mxu0
        %906 = vmatprep.mubr.f32.mxu0 0.0
        %907 = vmatmul.mubr.f32.gmra.mxu0 %v757
        %v908 = vpop.f32.mrf.mxu0
        %v909 = vadd.f32 %v805, %v908
        %v910 = vpop.f32.mrf.mxu0
        %911 = vmatprep.mubr.f32.mxu0 0.0
        %912 = vmatmul.mubr.f32.gmra.mxu0 %v758
        %v913 = vpop.f32.mrf.mxu0
        %v914 = vadd.f32 %v805, %v913
        %v915 = vpop.f32.mrf.mxu0
        %916 = vmatprep.mubr.f32.mxu0 0.0
        %917 = vmatmul.mubr.f32.gmra.mxu0 %v759
        %v918 = vpop.f32.mrf.mxu0
        %v919 = vadd.f32 %v805, %v918
        %v920 = vpop.f32.mrf.mxu0
        %921 = vmatprep.mubr.f32.mxu0 0.0
        %922 = vmatmul.mubr.f32.gmra.mxu0 %v760
        %v923 = vpop.f32.mrf.mxu0
        %v924 = vadd.f32 %v805, %v923
        %v925 = vpop.f32.mrf.mxu0
        %926 = vmatprep.mubr.f32.mxu0 0.0
        %927 = vmatmul.mubr.f32.gmra.mxu0 %v761
        %v928 = vpop.f32.mrf.mxu0
        %v929 = vadd.f32 %v805, %v928
        %v930 = vpop.f32.mrf.mxu0
        %931 = vmatprep.mubr.f32.mxu0 0.0
        %932 = vmatmul.mubr.f32.gmra.mxu0 %v762
        %v933 = vpop.f32.mrf.mxu0
        %v934 = vadd.f32 %v805, %v933
        %v935 = vpop.f32.mrf.mxu0
        %936 = vmatprep.mubr.f32.mxu0 0.0
        %937 = vmatmul.mubr.f32.gmra.mxu0 %v763
        %v938 = vpop.f32.mrf.mxu0
        %v939 = vadd.f32 %v805, %v938
        %v940 = vpop.f32.mrf.mxu0
        %941 = vmatprep.mubr.f32.mxu0 0.0
        %942 = vmatmul.mubr.f32.gmra.mxu0 %v764
        %v943 = vpop.f32.mrf.mxu0
        %v944 = vadd.f32 %v805, %v943
        %v945 = vpop.f32.mrf.mxu0
        %946 = vmatprep.mubr.f32.mxu0 0.0
        %947 = vmatmul.mubr.f32.gmra.mxu0 %v765
        %v948 = vpop.f32.mrf.mxu0
        %v949 = vadd.f32 %v805, %v948
        %v950 = vpop.f32.mrf.mxu0
        %951 = vmatprep.mubr.f32.mxu0 0.0
        %952 = vmatmul.mubr.f32.gmra.mxu0 %v766
        %v953 = vpop.f32.mrf.mxu0
        %v954 = vadd.f32 %v805, %v953
        %v955 = vpop.f32.mrf.mxu0
        %956 = vmatprep.mubr.f32.mxu0 0.0
        %957 = vmatmul.mubr.f32.gmra.mxu0 %v767
        %v958 = vpop.f32.mrf.mxu0
        %v959 = vadd.f32 %v805, %v958
        %v960 = vpop.f32.mrf.mxu0
        %961 = vmatprep.mubr.f32.mxu0 0.0
        %962 = vmatmul.mubr.f32.gmra.mxu0 %v768
        %v963 = vpop.f32.mrf.mxu0
        %v964 = vadd.f32 %v805, %v963
        %v965 = vpop.f32.mrf.mxu0
        %966 = vmatprep.mubr.f32.mxu0 0.0
        %967 = vmatmul.mubr.f32.gmra.mxu0 %v769
        %v968 = vpop.f32.mrf.mxu0
        %v969 = vadd.f32 %v805, %v968
        %v970 = vpop.f32.mrf.mxu0
        %971 = vmatprep.mubr.f32.mxu0 0.0
        %972 = vmatmul.mubr.f32.gmra.mxu0 %v770
        %v973 = vpop.f32.mrf.mxu0
        %v974 = vadd.f32 %v805, %v973
        %v975 = vpop.f32.mrf.mxu0
        %976 = vmatprep.mubr.f32.mxu0 0.0
        %977 = vmatmul.mubr.f32.gmra.mxu0 %v771
        %v978 = vpop.f32.mrf.mxu0
        %v979 = vadd.f32 %v805, %v978
        %v980 = vpop.f32.mrf.mxu0
        %981 = vmatprep.mubr.f32.mxu0 0.0
        %982 = vmatmul.mubr.f32.gmra.mxu0 %v772
        %v983 = vpop.f32.mrf.mxu0
        %v984 = vadd.f32 %v805, %v983
        %v985 = vpop.f32.mrf.mxu0
        %986 = vmatprep.mubr.f32.mxu0 0.0
        %987 = vmatmul.mubr.f32.gmra.mxu0 %v773
        %v988 = vpop.f32.mrf.mxu0
        %v989 = vadd.f32 %v805, %v988
        %v990 = vpop.f32.mrf.mxu0
        %991 = vmatprep.mubr.f32.mxu0 0.0
        %992 = vmatmul.mubr.f32.gmra.mxu0 %v774
        %v993 = vpop.f32.mrf.mxu0
        %v994 = vadd.f32 %v805, %v993
        %v995 = vpop.f32.mrf.mxu0
        %996 = vmatprep.mubr.f32.mxu0 0.0
        %997 = vmatmul.mubr.f32.gmra.mxu0 %v775
        %v998 = vpop.f32.mrf.mxu0
        %v999 = vadd.f32 %v805, %v998
        %v1000 = vpop.f32.mrf.mxu0
        %1001 = vmatprep.mubr.f32.mxu0 0.0
        %1002 = vmatmul.mubr.f32.gmra.mxu0 %v776
        %v1003 = vpop.f32.mrf.mxu0
        %v1004 = vadd.f32 %v805, %v1003
        %v1005 = vpop.f32.mrf.mxu0
        %1006 = vmatprep.mubr.f32.mxu0 0.0
        %1007 = vmatmul.mubr.f32.gmra.mxu0 %v777
        %v1008 = vpop.f32.mrf.mxu0
        %v1009 = vadd.f32 %v805, %v1008
        %v1010 = vpop.f32.mrf.mxu0
        %1011 = vmatprep.mubr.f32.mxu0 0.0
        %1012 = vmatmul.mubr.f32.gmra.mxu0 %v778
        %v1013 = vpop.f32.mrf.mxu0
        %v1014 = vadd.f32 %v805, %v1013
        %v1015 = vpop.f32.mrf.mxu0
        %1016 = vmatprep.mubr.f32.mxu0 0.0
        %1017 = vmatmul.mubr.f32.gmra.mxu0 %v779
        %v1018 = vpop.f32.mrf.mxu0
        %v1019 = vadd.f32 %v805, %v1018
        %v1020 = vpop.f32.mrf.mxu0
        %1021 = vmatprep.mubr.f32.mxu0 0.0
        %1022 = vmatmul.mubr.f32.gmra.mxu0 %v780
        %v1023 = vpop.f32.mrf.mxu0
        %v1024 = vadd.f32 %v805, %v1023
        %v1025 = vpop.f32.mrf.mxu0
        %1026 = vmatprep.mubr.f32.mxu0 0.0
        %1027 = vmatmul.mubr.f32.gmra.mxu0 %v781
        %v1028 = vpop.f32.mrf.mxu0
        %v1029 = vadd.f32 %v805, %v1028
        %v1030 = vpop.f32.mrf.mxu0
        %1031 = vdwg.mxu0
        %v1032 = vadd.f32 %v874, %v592
        %v1033 = vadd.f32 %v879, %v597
        %v1034 = vadd.f32 %v884, %v602
        %v1035 = vadd.f32 %v889, %v607
        %v1036 = vadd.f32 %v894, %v612
        %v1037 = vadd.f32 %v899, %v617
        %v1038 = vadd.f32 %v904, %v622
        %v1039 = vadd.f32 %v909, %v627
        %v1040 = vadd.f32 %v914, %v632
        %v1041 = vadd.f32 %v919, %v637
        %v1042 = vadd.f32 %v924, %v642
        %v1043 = vadd.f32 %v929, %v647
        %v1044 = vadd.f32 %v934, %v652
        %v1045 = vadd.f32 %v939, %v657
        %v1046 = vadd.f32 %v944, %v662
        %v1047 = vadd.f32 %v949, %v667
        %v1048 = vadd.f32 %v954, %v672
        %v1049 = vadd.f32 %v959, %v677
        %v1050 = vadd.f32 %v964, %v682
        %v1051 = vadd.f32 %v969, %v687
        %v1052 = vadd.f32 %v974, %v692
        %v1053 = vadd.f32 %v979, %v697
        %v1054 = vadd.f32 %v984, %v702
        %v1055 = vadd.f32 %v989, %v707
        %v1056 = vadd.f32 %v994, %v712
        %v1057 = vadd.f32 %v999, %v717
        %v1058 = vadd.f32 %v1004, %v722
        %v1059 = vadd.f32 %v1009, %v727
        %v1060 = vadd.f32 %v1014, %v732
        %v1061 = vadd.f32 %v1019, %v737
        %v1062 = vadd.f32 %v1024, %v742
        %v1063 = vadd.f32 %v1029, %v747
        %v1064 = vtanh.pop %v1032
        %v1065 = vtanh.pop %v1033
        %v1066 = vtanh.pop %v1034
        %v1067 = vtanh.pop %v1035
        %v1068 = vtanh.pop %v1036
        %v1069 = vtanh.pop %v1037
        %v1070 = vtanh.pop %v1038
        %v1071 = vtanh.pop %v1039
        %v1072 = vtanh.pop %v1040
        %v1073 = vtanh.pop %v1041
        %v1074 = vtanh.pop %v1042
        %v1075 = vtanh.pop %v1043
        %v1076 = vtanh.pop %v1044
        %v1077 = vtanh.pop %v1045
        %v1078 = vtanh.pop %v1046
        %v1079 = vtanh.pop %v1047
        %v1080 = vtanh.pop %v1048
        %v1081 = vtanh.pop %v1049
        %v1082 = vtanh.pop %v1050
        %v1083 = vtanh.pop %v1051
        %v1084 = vtanh.pop %v1052
        %v1085 = vtanh.pop %v1053
        %v1086 = vtanh.pop %v1054
        %v1087 = vtanh.pop %v1055
        %v1088 = vtanh.pop %v1056
        %v1089 = vtanh.pop %v1057
        %v1090 = vtanh.pop %v1058
        %v1091 = vtanh.pop %v1059
        %v1092 = vtanh.pop %v1060
        %v1093 = vtanh.pop %v1061
        %v1094 = vtanh.pop %v1062
        %v1095 = vtanh.pop %v1063
        %s1096 = scalar_lea.vmem [#allocation2], 384
        %v1097 = vld [vmem:[%s1096] sm:$0xff]
        %v1098 = vld [vmem:[%s1096 + $0x8] sm:$0xff]
        %v1099 = vld [vmem:[%s1096 + $0x10] sm:$0xff]
        %v1100 = vld [vmem:[%s1096 + $0x18] sm:$0xff]
        %v1101 = vld [vmem:[%s1096 + $0x20] sm:$0xff]
        %v1102 = vld [vmem:[%s1096 + $0x28] sm:$0xff]
        %v1103 = vld [vmem:[%s1096 + $0x30] sm:$0xff]
        %v1104 = vld [vmem:[%s1096 + $0x38] sm:$0xff]
        %v1105 = vld [vmem:[%s1096 + $0x40] sm:$0xff]
        %v1106 = vld [vmem:[%s1096 + $0x48] sm:$0xff]
        %v1107 = vld [vmem:[%s1096 + $0x50] sm:$0xff]
        %v1108 = vld [vmem:[%s1096 + $0x58] sm:$0xff]
        %v1109 = vld [vmem:[%s1096 + $0x60] sm:$0xff]
        %v1110 = vld [vmem:[%s1096 + $0x68] sm:$0xff]
        %v1111 = vld [vmem:[%s1096 + $0x70] sm:$0xff]
        %v1112 = vld [vmem:[%s1096 + $0x78] sm:$0xff]
        %s1113 = scalar_lea.vmem %s2, 3
        %v1114 = vld [vmem:[%s1113] sm:$0x1]
        %v1116 = vlaneseq
        %v1117 = vshrl.u32 %v1116, 7
        %v1118 = vsub.s32 0, %v1117
        %v1119 = vrot.slane %v1114, %v1118
        %1121 = vmatprep.subr.mxu0 0.0
        %1122 = vmatpush1.msra.mxu0 %v1112
        %1123 = vmatprep.subr.mxu0 0.0
        %1124 = vmatpush1.msra.mxu0 %v1111
        %1125 = vmatprep.subr.mxu0 0.0
        %1126 = vmatpush1.msra.mxu0 %v1110
        %1127 = vmatprep.subr.mxu0 0.0
        %1128 = vmatpush1.msra.mxu0 %v1109
        %1129 = vmatprep.subr.mxu0 0.0
        %1130 = vmatpush1.msra.mxu0 %v1108
        %1131 = vmatprep.subr.mxu0 0.0
        %1132 = vmatpush1.msra.mxu0 %v1107
        %1133 = vmatprep.subr.mxu0 0.0
        %1134 = vmatpush1.msra.mxu0 %v1106
        %1135 = vmatprep.subr.mxu0 0.0
        %1136 = vmatpush1.msra.mxu0 %v1105
        %1137 = vmatprep.subr.mxu0 0.0
        %1138 = vmatpush1.msra.mxu0 %v1104
        %1139 = vmatprep.subr.mxu0 0.0
        %1140 = vmatpush1.msra.mxu0 %v1103
        %1141 = vmatprep.subr.mxu0 0.0
        %1142 = vmatpush1.msra.mxu0 %v1102
        %1143 = vmatprep.subr.mxu0 0.0
        %1144 = vmatpush1.msra.mxu0 %v1101
        %1145 = vmatprep.subr.mxu0 0.0
        %1146 = vmatpush1.msra.mxu0 %v1100
        %1147 = vmatprep.subr.mxu0 0.0
        %1148 = vmatpush1.msra.mxu0 %v1099
        %1149 = vmatprep.subr.mxu0 0.0
        %1150 = vmatpush1.msra.mxu0 %v1098
        %1151 = vmatprep.subr.mxu0 0.0
        %1152 = vmatpush1.msra.mxu0 %v1097
        %1153 = vmatprep.subr.mxu0 0.0
        %1154 = vmatpush2.msra.mxu0 0.0
        %1155 = vmatprep.subr.mxu0 0.0
        %1156 = vmatpush2.msra.mxu0 0.0
        %1157 = vmatprep.subr.mxu0 0.0
        %1158 = vmatpush2.msra.mxu0 0.0
        %1159 = vmatprep.subr.mxu0 0.0
        %1160 = vmatpush2.msra.mxu0 0.0
        %1161 = vmatprep.subr.mxu0 0.0
        %1162 = vmatpush2.msra.mxu0 0.0
        %1163 = vmatprep.subr.mxu0 0.0
        %1164 = vmatpush2.msra.mxu0 0.0
        %1165 = vmatprep.subr.mxu0 0.0
        %1166 = vmatpush2.msra.mxu0 0.0
        %1167 = vmatprep.subr.mxu0 0.0
        %1168 = vmatpush2.msra.mxu0 0.0
        %1169 = vmatprep.subr.mxu0 0.0
        %1170 = vmatpush2.msra.mxu0 0.0
        %1171 = vmatprep.subr.mxu0 0.0
        %1172 = vmatpush2.msra.mxu0 0.0
        %1173 = vmatprep.subr.mxu0 0.0
        %1174 = vmatpush2.msra.mxu0 0.0
        %1175 = vmatprep.subr.mxu0 0.0
        %1176 = vmatpush2.msra.mxu0 0.0
        %1177 = vmatprep.subr.mxu0 0.0
        %1178 = vmatpush2.msra.mxu0 0.0
        %1179 = vmatprep.subr.mxu0 0.0
        %1180 = vmatpush2.msra.mxu0 0.0
        %1181 = vmatprep.subr.mxu0 0.0
        %1182 = vmatpush2.msra.mxu0 0.0
        %1183 = vmatprep.subr.mxu0 0.0
        %1184 = vmatpush2.msra.mxu0 0.0
        %1185 = vmatprep.mubr.f32.mxu0 0.0
        %1186 = vmatmul.mubr.f32.gmra.mxu0 %v1064
        %v1187 = vpop.f32.mrf.mxu0
        %v1188 = vadd.f32 %v1119, %v1187
        %v1189 = vpop.f32.mrf.mxu0
        %1190 = vmatprep.mubr.f32.mxu0 0.0
        %1191 = vmatmul.mubr.f32.gmra.mxu0 %v1065
        %v1192 = vpop.f32.mrf.mxu0
        %v1193 = vadd.f32 %v1119, %v1192
        %v1194 = vpop.f32.mrf.mxu0
        %1195 = vmatprep.mubr.f32.mxu0 0.0
        %1196 = vmatmul.mubr.f32.gmra.mxu0 %v1066
        %v1197 = vpop.f32.mrf.mxu0
        %v1198 = vadd.f32 %v1119, %v1197
        %v1199 = vpop.f32.mrf.mxu0
        %1200 = vmatprep.mubr.f32.mxu0 0.0
        %1201 = vmatmul.mubr.f32.gmra.mxu0 %v1067
        %v1202 = vpop.f32.mrf.mxu0
        %v1203 = vadd.f32 %v1119, %v1202
        %v1204 = vpop.f32.mrf.mxu0
        %1205 = vmatprep.mubr.f32.mxu0 0.0
        %1206 = vmatmul.mubr.f32.gmra.mxu0 %v1068
        %v1207 = vpop.f32.mrf.mxu0
        %v1208 = vadd.f32 %v1119, %v1207
        %v1209 = vpop.f32.mrf.mxu0
        %1210 = vmatprep.mubr.f32.mxu0 0.0
        %1211 = vmatmul.mubr.f32.gmra.mxu0 %v1069
        %v1212 = vpop.f32.mrf.mxu0
        %v1213 = vadd.f32 %v1119, %v1212
        %v1214 = vpop.f32.mrf.mxu0
        %1215 = vmatprep.mubr.f32.mxu0 0.0
        %1216 = vmatmul.mubr.f32.gmra.mxu0 %v1070
        %v1217 = vpop.f32.mrf.mxu0
        %v1218 = vadd.f32 %v1119, %v1217
        %v1219 = vpop.f32.mrf.mxu0
        %1220 = vmatprep.mubr.f32.mxu0 0.0
        %1221 = vmatmul.mubr.f32.gmra.mxu0 %v1071
        %v1222 = vpop.f32.mrf.mxu0
        %v1223 = vadd.f32 %v1119, %v1222
        %v1224 = vpop.f32.mrf.mxu0
        %1225 = vmatprep.mubr.f32.mxu0 0.0
        %1226 = vmatmul.mubr.f32.gmra.mxu0 %v1072
        %v1227 = vpop.f32.mrf.mxu0
        %v1228 = vadd.f32 %v1119, %v1227
        %v1229 = vpop.f32.mrf.mxu0
        %1230 = vmatprep.mubr.f32.mxu0 0.0
        %1231 = vmatmul.mubr.f32.gmra.mxu0 %v1073
        %v1232 = vpop.f32.mrf.mxu0
        %v1233 = vadd.f32 %v1119, %v1232
        %v1234 = vpop.f32.mrf.mxu0
        %1235 = vmatprep.mubr.f32.mxu0 0.0
        %1236 = vmatmul.mubr.f32.gmra.mxu0 %v1074
        %v1237 = vpop.f32.mrf.mxu0
        %v1238 = vadd.f32 %v1119, %v1237
        %v1239 = vpop.f32.mrf.mxu0
        %1240 = vmatprep.mubr.f32.mxu0 0.0
        %1241 = vmatmul.mubr.f32.gmra.mxu0 %v1075
        %v1242 = vpop.f32.mrf.mxu0
        %v1243 = vadd.f32 %v1119, %v1242
        %v1244 = vpop.f32.mrf.mxu0
        %1245 = vmatprep.mubr.f32.mxu0 0.0
        %1246 = vmatmul.mubr.f32.gmra.mxu0 %v1076
        %v1247 = vpop.f32.mrf.mxu0
        %v1248 = vadd.f32 %v1119, %v1247
        %v1249 = vpop.f32.mrf.mxu0
        %1250 = vmatprep.mubr.f32.mxu0 0.0
        %1251 = vmatmul.mubr.f32.gmra.mxu0 %v1077
        %v1252 = vpop.f32.mrf.mxu0
        %v1253 = vadd.f32 %v1119, %v1252
        %v1254 = vpop.f32.mrf.mxu0
        %1255 = vmatprep.mubr.f32.mxu0 0.0
        %1256 = vmatmul.mubr.f32.gmra.mxu0 %v1078
        %v1257 = vpop.f32.mrf.mxu0
        %v1258 = vadd.f32 %v1119, %v1257
        %v1259 = vpop.f32.mrf.mxu0
        %1260 = vmatprep.mubr.f32.mxu0 0.0
        %1261 = vmatmul.mubr.f32.gmra.mxu0 %v1079
        %v1262 = vpop.f32.mrf.mxu0
        %v1263 = vadd.f32 %v1119, %v1262
        %v1264 = vpop.f32.mrf.mxu0
        %1265 = vmatprep.mubr.f32.mxu0 0.0
        %1266 = vmatmul.mubr.f32.gmra.mxu0 %v1080
        %v1267 = vpop.f32.mrf.mxu0
        %v1268 = vadd.f32 %v1119, %v1267
        %v1269 = vpop.f32.mrf.mxu0
        %1270 = vmatprep.mubr.f32.mxu0 0.0
        %1271 = vmatmul.mubr.f32.gmra.mxu0 %v1081
        %v1272 = vpop.f32.mrf.mxu0
        %v1273 = vadd.f32 %v1119, %v1272
        %v1274 = vpop.f32.mrf.mxu0
        %1275 = vmatprep.mubr.f32.mxu0 0.0
        %1276 = vmatmul.mubr.f32.gmra.mxu0 %v1082
        %v1277 = vpop.f32.mrf.mxu0
        %v1278 = vadd.f32 %v1119, %v1277
        %v1279 = vpop.f32.mrf.mxu0
        %1280 = vmatprep.mubr.f32.mxu0 0.0
        %1281 = vmatmul.mubr.f32.gmra.mxu0 %v1083
        %v1282 = vpop.f32.mrf.mxu0
        %v1283 = vadd.f32 %v1119, %v1282
        %v1284 = vpop.f32.mrf.mxu0
        %1285 = vmatprep.mubr.f32.mxu0 0.0
        %1286 = vmatmul.mubr.f32.gmra.mxu0 %v1084
        %v1287 = vpop.f32.mrf.mxu0
        %v1288 = vadd.f32 %v1119, %v1287
        %v1289 = vpop.f32.mrf.mxu0
        %1290 = vmatprep.mubr.f32.mxu0 0.0
        %1291 = vmatmul.mubr.f32.gmra.mxu0 %v1085
        %v1292 = vpop.f32.mrf.mxu0
        %v1293 = vadd.f32 %v1119, %v1292
        %v1294 = vpop.f32.mrf.mxu0
        %1295 = vmatprep.mubr.f32.mxu0 0.0
        %1296 = vmatmul.mubr.f32.gmra.mxu0 %v1086
        %v1297 = vpop.f32.mrf.mxu0
        %v1298 = vadd.f32 %v1119, %v1297
        %v1299 = vpop.f32.mrf.mxu0
        %1300 = vmatprep.mubr.f32.mxu0 0.0
        %1301 = vmatmul.mubr.f32.gmra.mxu0 %v1087
        %v1302 = vpop.f32.mrf.mxu0
        %v1303 = vadd.f32 %v1119, %v1302
        %v1304 = vpop.f32.mrf.mxu0
        %1305 = vmatprep.mubr.f32.mxu0 0.0
        %1306 = vmatmul.mubr.f32.gmra.mxu0 %v1088
        %v1307 = vpop.f32.mrf.mxu0
        %v1308 = vadd.f32 %v1119, %v1307
        %v1309 = vpop.f32.mrf.mxu0
        %1310 = vmatprep.mubr.f32.mxu0 0.0
        %1311 = vmatmul.mubr.f32.gmra.mxu0 %v1089
        %v1312 = vpop.f32.mrf.mxu0
        %v1313 = vadd.f32 %v1119, %v1312
        %v1314 = vpop.f32.mrf.mxu0
        %1315 = vmatprep.mubr.f32.mxu0 0.0
        %1316 = vmatmul.mubr.f32.gmra.mxu0 %v1090
        %v1317 = vpop.f32.mrf.mxu0
        %v1318 = vadd.f32 %v1119, %v1317
        %v1319 = vpop.f32.mrf.mxu0
        %1320 = vmatprep.mubr.f32.mxu0 0.0
        %1321 = vmatmul.mubr.f32.gmra.mxu0 %v1091
        %v1322 = vpop.f32.mrf.mxu0
        %v1323 = vadd.f32 %v1119, %v1322
        %v1324 = vpop.f32.mrf.mxu0
        %1325 = vmatprep.mubr.f32.mxu0 0.0
        %1326 = vmatmul.mubr.f32.gmra.mxu0 %v1092
        %v1327 = vpop.f32.mrf.mxu0
        %v1328 = vadd.f32 %v1119, %v1327
        %v1329 = vpop.f32.mrf.mxu0
        %1330 = vmatprep.mubr.f32.mxu0 0.0
        %1331 = vmatmul.mubr.f32.gmra.mxu0 %v1093
        %v1332 = vpop.f32.mrf.mxu0
        %v1333 = vadd.f32 %v1119, %v1332
        %v1334 = vpop.f32.mrf.mxu0
        %1335 = vmatprep.mubr.f32.mxu0 0.0
        %1336 = vmatmul.mubr.f32.gmra.mxu0 %v1094
        %v1337 = vpop.f32.mrf.mxu0
        %v1338 = vadd.f32 %v1119, %v1337
        %v1339 = vpop.f32.mrf.mxu0
        %1340 = vmatprep.mubr.f32.mxu0 0.0
        %1341 = vmatmul.mubr.f32.gmra.mxu0 %v1095
        %v1342 = vpop.f32.mrf.mxu0
        %v1343 = vadd.f32 %v1119, %v1342
        %v1344 = vpop.f32.mrf.mxu0
        %1345 = vdwg.mxu0
        %v1346 = vtanh.pop %v1188
        %v1347 = vtanh.pop %v1193
        %v1348 = vtanh.pop %v1198
        %v1349 = vtanh.pop %v1203
        %v1350 = vtanh.pop %v1208
        %v1351 = vtanh.pop %v1213
        %v1352 = vtanh.pop %v1218
        %v1353 = vtanh.pop %v1223
        %v1354 = vtanh.pop %v1228
        %v1355 = vtanh.pop %v1233
        %v1356 = vtanh.pop %v1238
        %v1357 = vtanh.pop %v1243
        %v1358 = vtanh.pop %v1248
        %v1359 = vtanh.pop %v1253
        %v1360 = vtanh.pop %v1258
        %v1361 = vtanh.pop %v1263
        %v1362 = vtanh.pop %v1268
        %v1363 = vtanh.pop %v1273
        %v1364 = vtanh.pop %v1278
        %v1365 = vtanh.pop %v1283
        %v1366 = vtanh.pop %v1288
        %v1367 = vtanh.pop %v1293
        %v1368 = vtanh.pop %v1298
        %v1369 = vtanh.pop %v1303
        %v1370 = vtanh.pop %v1308
        %v1371 = vtanh.pop %v1313
        %v1372 = vtanh.pop %v1318
        %v1373 = vtanh.pop %v1323
        %v1374 = vtanh.pop %v1328
        %v1375 = vtanh.pop %v1333
        %v1376 = vtanh.pop %v1338
        %v1377 = vtanh.pop %v1343
        %s1378 = scalar_lea.vmem [#allocation2], 512
        %v1379 = vld [vmem:[%s1378] sm:$0xff]
        %v1380 = vld [vmem:[%s1378 + $0x8] sm:$0xff]
        %v1381 = vld [vmem:[%s1378 + $0x10] sm:$0xff]
        %v1382 = vld [vmem:[%s1378 + $0x18] sm:$0xff]
        %v1383 = vld [vmem:[%s1378 + $0x20] sm:$0xff]
        %v1384 = vld [vmem:[%s1378 + $0x28] sm:$0xff]
        %v1385 = vld [vmem:[%s1378 + $0x30] sm:$0xff]
        %v1386 = vld [vmem:[%s1378 + $0x38] sm:$0xff]
        %v1387 = vld [vmem:[%s1378 + $0x40] sm:$0xff]
        %v1388 = vld [vmem:[%s1378 + $0x48] sm:$0xff]
        %v1389 = vld [vmem:[%s1378 + $0x50] sm:$0xff]
        %v1390 = vld [vmem:[%s1378 + $0x58] sm:$0xff]
        %v1391 = vld [vmem:[%s1378 + $0x60] sm:$0xff]
        %v1392 = vld [vmem:[%s1378 + $0x68] sm:$0xff]
        %v1393 = vld [vmem:[%s1378 + $0x70] sm:$0xff]
        %v1394 = vld [vmem:[%s1378 + $0x78] sm:$0xff]
        %s1395 = scalar_lea.vmem %s2, 4
        %v1396 = vld [vmem:[%s1395] sm:$0x1]
        %v1398 = vlaneseq
        %v1399 = vshrl.u32 %v1398, 7
        %v1400 = vsub.s32 0, %v1399
        %v1401 = vrot.slane %v1396, %v1400
        %1403 = vmatprep.subr.mxu0 0.0
        %1404 = vmatpush1.msra.mxu0 %v1394
        %1405 = vmatprep.subr.mxu0 0.0
        %1406 = vmatpush1.msra.mxu0 %v1393
        %1407 = vmatprep.subr.mxu0 0.0
        %1408 = vmatpush1.msra.mxu0 %v1392
        %1409 = vmatprep.subr.mxu0 0.0
        %1410 = vmatpush1.msra.mxu0 %v1391
        %1411 = vmatprep.subr.mxu0 0.0
        %1412 = vmatpush1.msra.mxu0 %v1390
        %1413 = vmatprep.subr.mxu0 0.0
        %1414 = vmatpush1.msra.mxu0 %v1389
        %1415 = vmatprep.subr.mxu0 0.0
        %1416 = vmatpush1.msra.mxu0 %v1388
        %1417 = vmatprep.subr.mxu0 0.0
        %1418 = vmatpush1.msra.mxu0 %v1387
        %1419 = vmatprep.subr.mxu0 0.0
        %1420 = vmatpush1.msra.mxu0 %v1386
        %1421 = vmatprep.subr.mxu0 0.0
        %1422 = vmatpush1.msra.mxu0 %v1385
        %1423 = vmatprep.subr.mxu0 0.0
        %1424 = vmatpush1.msra.mxu0 %v1384
        %1425 = vmatprep.subr.mxu0 0.0
        %1426 = vmatpush1.msra.mxu0 %v1383
        %1427 = vmatprep.subr.mxu0 0.0
        %1428 = vmatpush1.msra.mxu0 %v1382
        %1429 = vmatprep.subr.mxu0 0.0
        %1430 = vmatpush1.msra.mxu0 %v1381
        %1431 = vmatprep.subr.mxu0 0.0
        %1432 = vmatpush1.msra.mxu0 %v1380
        %1433 = vmatprep.subr.mxu0 0.0
        %1434 = vmatpush1.msra.mxu0 %v1379
        %1435 = vmatprep.subr.mxu0 0.0
        %1436 = vmatpush2.msra.mxu0 0.0
        %1437 = vmatprep.subr.mxu0 0.0
        %1438 = vmatpush2.msra.mxu0 0.0
        %1439 = vmatprep.subr.mxu0 0.0
        %1440 = vmatpush2.msra.mxu0 0.0
        %1441 = vmatprep.subr.mxu0 0.0
        %1442 = vmatpush2.msra.mxu0 0.0
        %1443 = vmatprep.subr.mxu0 0.0
        %1444 = vmatpush2.msra.mxu0 0.0
        %1445 = vmatprep.subr.mxu0 0.0
        %1446 = vmatpush2.msra.mxu0 0.0
        %1447 = vmatprep.subr.mxu0 0.0
        %1448 = vmatpush2.msra.mxu0 0.0
        %1449 = vmatprep.subr.mxu0 0.0
        %1450 = vmatpush2.msra.mxu0 0.0
        %1451 = vmatprep.subr.mxu0 0.0
        %1452 = vmatpush2.msra.mxu0 0.0
        %1453 = vmatprep.subr.mxu0 0.0
        %1454 = vmatpush2.msra.mxu0 0.0
        %1455 = vmatprep.subr.mxu0 0.0
        %1456 = vmatpush2.msra.mxu0 0.0
        %1457 = vmatprep.subr.mxu0 0.0
        %1458 = vmatpush2.msra.mxu0 0.0
        %1459 = vmatprep.subr.mxu0 0.0
        %1460 = vmatpush2.msra.mxu0 0.0
        %1461 = vmatprep.subr.mxu0 0.0
        %1462 = vmatpush2.msra.mxu0 0.0
        %1463 = vmatprep.subr.mxu0 0.0
        %1464 = vmatpush2.msra.mxu0 0.0
        %1465 = vmatprep.subr.mxu0 0.0
        %1466 = vmatpush2.msra.mxu0 0.0
        %1467 = vmatprep.mubr.f32.mxu0 0.0
        %1468 = vmatmul.mubr.f32.gmra.mxu0 %v1346
        %v1469 = vpop.f32.mrf.mxu0
        %v1470 = vadd.f32 %v1401, %v1469
        %v1471 = vpop.f32.mrf.mxu0
        %1472 = vmatprep.mubr.f32.mxu0 0.0
        %1473 = vmatmul.mubr.f32.gmra.mxu0 %v1347
        %v1474 = vpop.f32.mrf.mxu0
        %v1475 = vadd.f32 %v1401, %v1474
        %v1476 = vpop.f32.mrf.mxu0
        %1477 = vmatprep.mubr.f32.mxu0 0.0
        %1478 = vmatmul.mubr.f32.gmra.mxu0 %v1348
        %v1479 = vpop.f32.mrf.mxu0
        %v1480 = vadd.f32 %v1401, %v1479
        %v1481 = vpop.f32.mrf.mxu0
        %1482 = vmatprep.mubr.f32.mxu0 0.0
        %1483 = vmatmul.mubr.f32.gmra.mxu0 %v1349
        %v1484 = vpop.f32.mrf.mxu0
        %v1485 = vadd.f32 %v1401, %v1484
        %v1486 = vpop.f32.mrf.mxu0
        %1487 = vmatprep.mubr.f32.mxu0 0.0
        %1488 = vmatmul.mubr.f32.gmra.mxu0 %v1350
        %v1489 = vpop.f32.mrf.mxu0
        %v1490 = vadd.f32 %v1401, %v1489
        %v1491 = vpop.f32.mrf.mxu0
        %1492 = vmatprep.mubr.f32.mxu0 0.0
        %1493 = vmatmul.mubr.f32.gmra.mxu0 %v1351
        %v1494 = vpop.f32.mrf.mxu0
        %v1495 = vadd.f32 %v1401, %v1494
        %v1496 = vpop.f32.mrf.mxu0
        %1497 = vmatprep.mubr.f32.mxu0 0.0
        %1498 = vmatmul.mubr.f32.gmra.mxu0 %v1352
        %v1499 = vpop.f32.mrf.mxu0
        %v1500 = vadd.f32 %v1401, %v1499
        %v1501 = vpop.f32.mrf.mxu0
        %1502 = vmatprep.mubr.f32.mxu0 0.0
        %1503 = vmatmul.mubr.f32.gmra.mxu0 %v1353
        %v1504 = vpop.f32.mrf.mxu0
        %v1505 = vadd.f32 %v1401, %v1504
        %v1506 = vpop.f32.mrf.mxu0
        %1507 = vmatprep.mubr.f32.mxu0 0.0
        %1508 = vmatmul.mubr.f32.gmra.mxu0 %v1354
        %v1509 = vpop.f32.mrf.mxu0
        %v1510 = vadd.f32 %v1401, %v1509
        %v1511 = vpop.f32.mrf.mxu0
        %1512 = vmatprep.mubr.f32.mxu0 0.0
        %1513 = vmatmul.mubr.f32.gmra.mxu0 %v1355
        %v1514 = vpop.f32.mrf.mxu0
        %v1515 = vadd.f32 %v1401, %v1514
        %v1516 = vpop.f32.mrf.mxu0
        %1517 = vmatprep.mubr.f32.mxu0 0.0
        %1518 = vmatmul.mubr.f32.gmra.mxu0 %v1356
        %v1519 = vpop.f32.mrf.mxu0
        %v1520 = vadd.f32 %v1401, %v1519
        %v1521 = vpop.f32.mrf.mxu0
        %1522 = vmatprep.mubr.f32.mxu0 0.0
        %1523 = vmatmul.mubr.f32.gmra.mxu0 %v1357
        %v1524 = vpop.f32.mrf.mxu0
        %v1525 = vadd.f32 %v1401, %v1524
        %v1526 = vpop.f32.mrf.mxu0
        %1527 = vmatprep.mubr.f32.mxu0 0.0
        %1528 = vmatmul.mubr.f32.gmra.mxu0 %v1358
        %v1529 = vpop.f32.mrf.mxu0
        %v1530 = vadd.f32 %v1401, %v1529
        %v1531 = vpop.f32.mrf.mxu0
        %1532 = vmatprep.mubr.f32.mxu0 0.0
        %1533 = vmatmul.mubr.f32.gmra.mxu0 %v1359
        %v1534 = vpop.f32.mrf.mxu0
        %v1535 = vadd.f32 %v1401, %v1534
        %v1536 = vpop.f32.mrf.mxu0
        %1537 = vmatprep.mubr.f32.mxu0 0.0
        %1538 = vmatmul.mubr.f32.gmra.mxu0 %v1360
        %v1539 = vpop.f32.mrf.mxu0
        %v1540 = vadd.f32 %v1401, %v1539
        %v1541 = vpop.f32.mrf.mxu0
        %1542 = vmatprep.mubr.f32.mxu0 0.0
        %1543 = vmatmul.mubr.f32.gmra.mxu0 %v1361
        %v1544 = vpop.f32.mrf.mxu0
        %v1545 = vadd.f32 %v1401, %v1544
        %v1546 = vpop.f32.mrf.mxu0
        %1547 = vmatprep.mubr.f32.mxu0 0.0
        %1548 = vmatmul.mubr.f32.gmra.mxu0 %v1362
        %v1549 = vpop.f32.mrf.mxu0
        %v1550 = vadd.f32 %v1401, %v1549
        %v1551 = vpop.f32.mrf.mxu0
        %1552 = vmatprep.mubr.f32.mxu0 0.0
        %1553 = vmatmul.mubr.f32.gmra.mxu0 %v1363
        %v1554 = vpop.f32.mrf.mxu0
        %v1555 = vadd.f32 %v1401, %v1554
        %v1556 = vpop.f32.mrf.mxu0
        %1557 = vmatprep.mubr.f32.mxu0 0.0
        %1558 = vmatmul.mubr.f32.gmra.mxu0 %v1364
        %v1559 = vpop.f32.mrf.mxu0
        %v1560 = vadd.f32 %v1401, %v1559
        %v1561 = vpop.f32.mrf.mxu0
        %1562 = vmatprep.mubr.f32.mxu0 0.0
        %1563 = vmatmul.mubr.f32.gmra.mxu0 %v1365
        %v1564 = vpop.f32.mrf.mxu0
        %v1565 = vadd.f32 %v1401, %v1564
        %v1566 = vpop.f32.mrf.mxu0
        %1567 = vmatprep.mubr.f32.mxu0 0.0
        %1568 = vmatmul.mubr.f32.gmra.mxu0 %v1366
        %v1569 = vpop.f32.mrf.mxu0
        %v1570 = vadd.f32 %v1401, %v1569
        %v1571 = vpop.f32.mrf.mxu0
        %1572 = vmatprep.mubr.f32.mxu0 0.0
        %1573 = vmatmul.mubr.f32.gmra.mxu0 %v1367
        %v1574 = vpop.f32.mrf.mxu0
        %v1575 = vadd.f32 %v1401, %v1574
        %v1576 = vpop.f32.mrf.mxu0
        %1577 = vmatprep.mubr.f32.mxu0 0.0
        %1578 = vmatmul.mubr.f32.gmra.mxu0 %v1368
        %v1579 = vpop.f32.mrf.mxu0
        %v1580 = vadd.f32 %v1401, %v1579
        %v1581 = vpop.f32.mrf.mxu0
        %1582 = vmatprep.mubr.f32.mxu0 0.0
        %1583 = vmatmul.mubr.f32.gmra.mxu0 %v1369
        %v1584 = vpop.f32.mrf.mxu0
        %v1585 = vadd.f32 %v1401, %v1584
        %v1586 = vpop.f32.mrf.mxu0
        %1587 = vmatprep.mubr.f32.mxu0 0.0
        %1588 = vmatmul.mubr.f32.gmra.mxu0 %v1370
        %v1589 = vpop.f32.mrf.mxu0
        %v1590 = vadd.f32 %v1401, %v1589
        %v1591 = vpop.f32.mrf.mxu0
        %1592 = vmatprep.mubr.f32.mxu0 0.0
        %1593 = vmatmul.mubr.f32.gmra.mxu0 %v1371
        %v1594 = vpop.f32.mrf.mxu0
        %v1595 = vadd.f32 %v1401, %v1594
        %v1596 = vpop.f32.mrf.mxu0
        %1597 = vmatprep.mubr.f32.mxu0 0.0
        %1598 = vmatmul.mubr.f32.gmra.mxu0 %v1372
        %v1599 = vpop.f32.mrf.mxu0
        %v1600 = vadd.f32 %v1401, %v1599
        %v1601 = vpop.f32.mrf.mxu0
        %1602 = vmatprep.mubr.f32.mxu0 0.0
        %1603 = vmatmul.mubr.f32.gmra.mxu0 %v1373
        %v1604 = vpop.f32.mrf.mxu0
        %v1605 = vadd.f32 %v1401, %v1604
        %v1606 = vpop.f32.mrf.mxu0
        %1607 = vmatprep.mubr.f32.mxu0 0.0
        %1608 = vmatmul.mubr.f32.gmra.mxu0 %v1374
        %v1609 = vpop.f32.mrf.mxu0
        %v1610 = vadd.f32 %v1401, %v1609
        %v1611 = vpop.f32.mrf.mxu0
        %1612 = vmatprep.mubr.f32.mxu0 0.0
        %1613 = vmatmul.mubr.f32.gmra.mxu0 %v1375
        %v1614 = vpop.f32.mrf.mxu0
        %v1615 = vadd.f32 %v1401, %v1614
        %v1616 = vpop.f32.mrf.mxu0
        %1617 = vmatprep.mubr.f32.mxu0 0.0
        %1618 = vmatmul.mubr.f32.gmra.mxu0 %v1376
        %v1619 = vpop.f32.mrf.mxu0
        %v1620 = vadd.f32 %v1401, %v1619
        %v1621 = vpop.f32.mrf.mxu0
        %1622 = vmatprep.mubr.f32.mxu0 0.0
        %1623 = vmatmul.mubr.f32.gmra.mxu0 %v1377
        %v1624 = vpop.f32.mrf.mxu0
        %v1625 = vadd.f32 %v1401, %v1624
        %v1626 = vpop.f32.mrf.mxu0
        %1627 = vdwg.mxu0
        %v1628 = vadd.f32 %v1470, %v1064
        %v1629 = vadd.f32 %v1475, %v1065
        %v1630 = vadd.f32 %v1480, %v1066
        %v1631 = vadd.f32 %v1485, %v1067
        %v1632 = vadd.f32 %v1490, %v1068
        %v1633 = vadd.f32 %v1495, %v1069
        %v1634 = vadd.f32 %v1500, %v1070
        %v1635 = vadd.f32 %v1505, %v1071
        %v1636 = vadd.f32 %v1510, %v1072
        %v1637 = vadd.f32 %v1515, %v1073
        %v1638 = vadd.f32 %v1520, %v1074
        %v1639 = vadd.f32 %v1525, %v1075
        %v1640 = vadd.f32 %v1530, %v1076
        %v1641 = vadd.f32 %v1535, %v1077
        %v1642 = vadd.f32 %v1540, %v1078
        %v1643 = vadd.f32 %v1545, %v1079
        %v1644 = vadd.f32 %v1550, %v1080
        %v1645 = vadd.f32 %v1555, %v1081
        %v1646 = vadd.f32 %v1560, %v1082
        %v1647 = vadd.f32 %v1565, %v1083
        %v1648 = vadd.f32 %v1570, %v1084
        %v1649 = vadd.f32 %v1575, %v1085
        %v1650 = vadd.f32 %v1580, %v1086
        %v1651 = vadd.f32 %v1585, %v1087
        %v1652 = vadd.f32 %v1590, %v1088
        %v1653 = vadd.f32 %v1595, %v1089
        %v1654 = vadd.f32 %v1600, %v1090
        %v1655 = vadd.f32 %v1605, %v1091
        %v1656 = vadd.f32 %v1610, %v1092
        %v1657 = vadd.f32 %v1615, %v1093
        %v1658 = vadd.f32 %v1620, %v1094
        %v1659 = vadd.f32 %v1625, %v1095
        %v1660 = vtanh.pop %v1628
        %v1661 = vtanh.pop %v1629
        %v1662 = vtanh.pop %v1630
        %v1663 = vtanh.pop %v1631
        %v1664 = vtanh.pop %v1632
        %v1665 = vtanh.pop %v1633
        %v1666 = vtanh.pop %v1634
        %v1667 = vtanh.pop %v1635
        %v1668 = vtanh.pop %v1636
        %v1669 = vtanh.pop %v1637
        %v1670 = vtanh.pop %v1638
        %v1671 = vtanh.pop %v1639
        %v1672 = vtanh.pop %v1640
        %v1673 = vtanh.pop %v1641
        %v1674 = vtanh.pop %v1642
        %v1675 = vtanh.pop %v1643
        %v1676 = vtanh.pop %v1644
        %v1677 = vtanh.pop %v1645
        %v1678 = vtanh.pop %v1646
        %v1679 = vtanh.pop %v1647
        %v1680 = vtanh.pop %v1648
        %v1681 = vtanh.pop %v1649
        %v1682 = vtanh.pop %v1650
        %v1683 = vtanh.pop %v1651
        %v1684 = vtanh.pop %v1652
        %v1685 = vtanh.pop %v1653
        %v1686 = vtanh.pop %v1654
        %v1687 = vtanh.pop %v1655
        %v1688 = vtanh.pop %v1656
        %v1689 = vtanh.pop %v1657
        %v1690 = vtanh.pop %v1658
        %v1691 = vtanh.pop %v1659
        %s1692 = scalar_lea.vmem [#allocation2], 640
        %v1693 = vld [vmem:[%s1692] sm:$0xff]
        %v1694 = vld [vmem:[%s1692 + $0x8] sm:$0xff]
        %v1695 = vld [vmem:[%s1692 + $0x10] sm:$0xff]
        %v1696 = vld [vmem:[%s1692 + $0x18] sm:$0xff]
        %v1697 = vld [vmem:[%s1692 + $0x20] sm:$0xff]
        %v1698 = vld [vmem:[%s1692 + $0x28] sm:$0xff]
        %v1699 = vld [vmem:[%s1692 + $0x30] sm:$0xff]
        %v1700 = vld [vmem:[%s1692 + $0x38] sm:$0xff]
        %v1701 = vld [vmem:[%s1692 + $0x40] sm:$0xff]
        %v1702 = vld [vmem:[%s1692 + $0x48] sm:$0xff]
        %v1703 = vld [vmem:[%s1692 + $0x50] sm:$0xff]
        %v1704 = vld [vmem:[%s1692 + $0x58] sm:$0xff]
        %v1705 = vld [vmem:[%s1692 + $0x60] sm:$0xff]
        %v1706 = vld [vmem:[%s1692 + $0x68] sm:$0xff]
        %v1707 = vld [vmem:[%s1692 + $0x70] sm:$0xff]
        %v1708 = vld [vmem:[%s1692 + $0x78] sm:$0xff]
        %s1709 = scalar_lea.vmem %s2, 5
        %v1710 = vld [vmem:[%s1709] sm:$0x1]
        %v1712 = vlaneseq
        %v1713 = vshrl.u32 %v1712, 7
        %v1714 = vsub.s32 0, %v1713
        %v1715 = vrot.slane %v1710, %v1714
        %1717 = vmatprep.subr.mxu0 0.0
        %1718 = vmatpush1.msra.mxu0 %v1708
        %1719 = vmatprep.subr.mxu0 0.0
        %1720 = vmatpush1.msra.mxu0 %v1707
        %1721 = vmatprep.subr.mxu0 0.0
        %1722 = vmatpush1.msra.mxu0 %v1706
        %1723 = vmatprep.subr.mxu0 0.0
        %1724 = vmatpush1.msra.mxu0 %v1705
        %1725 = vmatprep.subr.mxu0 0.0
        %1726 = vmatpush1.msra.mxu0 %v1704
        %1727 = vmatprep.subr.mxu0 0.0
        %1728 = vmatpush1.msra.mxu0 %v1703
        %1729 = vmatprep.subr.mxu0 0.0
        %1730 = vmatpush1.msra.mxu0 %v1702
        %1731 = vmatprep.subr.mxu0 0.0
        %1732 = vmatpush1.msra.mxu0 %v1701
        %1733 = vmatprep.subr.mxu0 0.0
        %1734 = vmatpush1.msra.mxu0 %v1700
        %1735 = vmatprep.subr.mxu0 0.0
        %1736 = vmatpush1.msra.mxu0 %v1699
        %1737 = vmatprep.subr.mxu0 0.0
        %1738 = vmatpush1.msra.mxu0 %v1698
        %1739 = vmatprep.subr.mxu0 0.0
        %1740 = vmatpush1.msra.mxu0 %v1697
        %1741 = vmatprep.subr.mxu0 0.0
        %1742 = vmatpush1.msra.mxu0 %v1696
        %1743 = vmatprep.subr.mxu0 0.0
        %1744 = vmatpush1.msra.mxu0 %v1695
        %1745 = vmatprep.subr.mxu0 0.0
        %1746 = vmatpush1.msra.mxu0 %v1694
        %1747 = vmatprep.subr.mxu0 0.0
        %1748 = vmatpush1.msra.mxu0 %v1693
        %1749 = vmatprep.subr.mxu0 0.0
        %1750 = vmatpush2.msra.mxu0 0.0
        %1751 = vmatprep.subr.mxu0 0.0
        %1752 = vmatpush2.msra.mxu0 0.0
        %1753 = vmatprep.subr.mxu0 0.0
        %1754 = vmatpush2.msra.mxu0 0.0
        %1755 = vmatprep.subr.mxu0 0.0
        %1756 = vmatpush2.msra.mxu0 0.0
        %1757 = vmatprep.subr.mxu0 0.0
        %1758 = vmatpush2.msra.mxu0 0.0
        %1759 = vmatprep.subr.mxu0 0.0
        %1760 = vmatpush2.msra.mxu0 0.0
        %1761 = vmatprep.subr.mxu0 0.0
        %1762 = vmatpush2.msra.mxu0 0.0
        %1763 = vmatprep.subr.mxu0 0.0
        %1764 = vmatpush2.msra.mxu0 0.0
        %1765 = vmatprep.subr.mxu0 0.0
        %1766 = vmatpush2.msra.mxu0 0.0
        %1767 = vmatprep.subr.mxu0 0.0
        %1768 = vmatpush2.msra.mxu0 0.0
        %1769 = vmatprep.subr.mxu0 0.0
        %1770 = vmatpush2.msra.mxu0 0.0
        %1771 = vmatprep.subr.mxu0 0.0
        %1772 = vmatpush2.msra.mxu0 0.0
        %1773 = vmatprep.subr.mxu0 0.0
        %1774 = vmatpush2.msra.mxu0 0.0
        %1775 = vmatprep.subr.mxu0 0.0
        %1776 = vmatpush2.msra.mxu0 0.0
        %1777 = vmatprep.subr.mxu0 0.0
        %1778 = vmatpush2.msra.mxu0 0.0
        %1779 = vmatprep.subr.mxu0 0.0
        %1780 = vmatpush2.msra.mxu0 0.0
        %1781 = vmatprep.mubr.f32.mxu0 0.0
        %1782 = vmatmul.mubr.f32.gmra.mxu0 %v1660
        %v1783 = vpop.f32.mrf.mxu0
        %v1784 = vadd.f32 %v1715, %v1783
        %v1785 = vpop.f32.mrf.mxu0
        %1786 = vmatprep.mubr.f32.mxu0 0.0
        %1787 = vmatmul.mubr.f32.gmra.mxu0 %v1661
        %v1788 = vpop.f32.mrf.mxu0
        %v1789 = vadd.f32 %v1715, %v1788
        %v1790 = vpop.f32.mrf.mxu0
        %1791 = vmatprep.mubr.f32.mxu0 0.0
        %1792 = vmatmul.mubr.f32.gmra.mxu0 %v1662
        %v1793 = vpop.f32.mrf.mxu0
        %v1794 = vadd.f32 %v1715, %v1793
        %v1795 = vpop.f32.mrf.mxu0
        %1796 = vmatprep.mubr.f32.mxu0 0.0
        %1797 = vmatmul.mubr.f32.gmra.mxu0 %v1663
        %v1798 = vpop.f32.mrf.mxu0
        %v1799 = vadd.f32 %v1715, %v1798
        %v1800 = vpop.f32.mrf.mxu0
        %1801 = vmatprep.mubr.f32.mxu0 0.0
        %1802 = vmatmul.mubr.f32.gmra.mxu0 %v1664
        %v1803 = vpop.f32.mrf.mxu0
        %v1804 = vadd.f32 %v1715, %v1803
        %v1805 = vpop.f32.mrf.mxu0
        %1806 = vmatprep.mubr.f32.mxu0 0.0
        %1807 = vmatmul.mubr.f32.gmra.mxu0 %v1665
        %v1808 = vpop.f32.mrf.mxu0
        %v1809 = vadd.f32 %v1715, %v1808
        %v1810 = vpop.f32.mrf.mxu0
        %1811 = vmatprep.mubr.f32.mxu0 0.0
        %1812 = vmatmul.mubr.f32.gmra.mxu0 %v1666
        %v1813 = vpop.f32.mrf.mxu0
        %v1814 = vadd.f32 %v1715, %v1813
        %v1815 = vpop.f32.mrf.mxu0
        %1816 = vmatprep.mubr.f32.mxu0 0.0
        %1817 = vmatmul.mubr.f32.gmra.mxu0 %v1667
        %v1818 = vpop.f32.mrf.mxu0
        %v1819 = vadd.f32 %v1715, %v1818
        %v1820 = vpop.f32.mrf.mxu0
        %1821 = vmatprep.mubr.f32.mxu0 0.0
        %1822 = vmatmul.mubr.f32.gmra.mxu0 %v1668
        %v1823 = vpop.f32.mrf.mxu0
        %v1824 = vadd.f32 %v1715, %v1823
        %v1825 = vpop.f32.mrf.mxu0
        %1826 = vmatprep.mubr.f32.mxu0 0.0
        %1827 = vmatmul.mubr.f32.gmra.mxu0 %v1669
        %v1828 = vpop.f32.mrf.mxu0
        %v1829 = vadd.f32 %v1715, %v1828
        %v1830 = vpop.f32.mrf.mxu0
        %1831 = vmatprep.mubr.f32.mxu0 0.0
        %1832 = vmatmul.mubr.f32.gmra.mxu0 %v1670
        %v1833 = vpop.f32.mrf.mxu0
        %v1834 = vadd.f32 %v1715, %v1833
        %v1835 = vpop.f32.mrf.mxu0
        %1836 = vmatprep.mubr.f32.mxu0 0.0
        %1837 = vmatmul.mubr.f32.gmra.mxu0 %v1671
        %v1838 = vpop.f32.mrf.mxu0
        %v1839 = vadd.f32 %v1715, %v1838
        %v1840 = vpop.f32.mrf.mxu0
        %1841 = vmatprep.mubr.f32.mxu0 0.0
        %1842 = vmatmul.mubr.f32.gmra.mxu0 %v1672
        %v1843 = vpop.f32.mrf.mxu0
        %v1844 = vadd.f32 %v1715, %v1843
        %v1845 = vpop.f32.mrf.mxu0
        %1846 = vmatprep.mubr.f32.mxu0 0.0
        %1847 = vmatmul.mubr.f32.gmra.mxu0 %v1673
        %v1848 = vpop.f32.mrf.mxu0
        %v1849 = vadd.f32 %v1715, %v1848
        %v1850 = vpop.f32.mrf.mxu0
        %1851 = vmatprep.mubr.f32.mxu0 0.0
        %1852 = vmatmul.mubr.f32.gmra.mxu0 %v1674
        %v1853 = vpop.f32.mrf.mxu0
        %v1854 = vadd.f32 %v1715, %v1853
        %v1855 = vpop.f32.mrf.mxu0
        %1856 = vmatprep.mubr.f32.mxu0 0.0
        %1857 = vmatmul.mubr.f32.gmra.mxu0 %v1675
        %v1858 = vpop.f32.mrf.mxu0
        %v1859 = vadd.f32 %v1715, %v1858
        %v1860 = vpop.f32.mrf.mxu0
        %1861 = vmatprep.mubr.f32.mxu0 0.0
        %1862 = vmatmul.mubr.f32.gmra.mxu0 %v1676
        %v1863 = vpop.f32.mrf.mxu0
        %v1864 = vadd.f32 %v1715, %v1863
        %v1865 = vpop.f32.mrf.mxu0
        %1866 = vmatprep.mubr.f32.mxu0 0.0
        %1867 = vmatmul.mubr.f32.gmra.mxu0 %v1677
        %v1868 = vpop.f32.mrf.mxu0
        %v1869 = vadd.f32 %v1715, %v1868
        %v1870 = vpop.f32.mrf.mxu0
        %1871 = vmatprep.mubr.f32.mxu0 0.0
        %1872 = vmatmul.mubr.f32.gmra.mxu0 %v1678
        %v1873 = vpop.f32.mrf.mxu0
        %v1874 = vadd.f32 %v1715, %v1873
        %v1875 = vpop.f32.mrf.mxu0
        %1876 = vmatprep.mubr.f32.mxu0 0.0
        %1877 = vmatmul.mubr.f32.gmra.mxu0 %v1679
        %v1878 = vpop.f32.mrf.mxu0
        %v1879 = vadd.f32 %v1715, %v1878
        %v1880 = vpop.f32.mrf.mxu0
        %1881 = vmatprep.mubr.f32.mxu0 0.0
        %1882 = vmatmul.mubr.f32.gmra.mxu0 %v1680
        %v1883 = vpop.f32.mrf.mxu0
        %v1884 = vadd.f32 %v1715, %v1883
        %v1885 = vpop.f32.mrf.mxu0
        %1886 = vmatprep.mubr.f32.mxu0 0.0
        %1887 = vmatmul.mubr.f32.gmra.mxu0 %v1681
        %v1888 = vpop.f32.mrf.mxu0
        %v1889 = vadd.f32 %v1715, %v1888
        %v1890 = vpop.f32.mrf.mxu0
        %1891 = vmatprep.mubr.f32.mxu0 0.0
        %1892 = vmatmul.mubr.f32.gmra.mxu0 %v1682
        %v1893 = vpop.f32.mrf.mxu0
        %v1894 = vadd.f32 %v1715, %v1893
        %v1895 = vpop.f32.mrf.mxu0
        %1896 = vmatprep.mubr.f32.mxu0 0.0
        %1897 = vmatmul.mubr.f32.gmra.mxu0 %v1683
        %v1898 = vpop.f32.mrf.mxu0
        %v1899 = vadd.f32 %v1715, %v1898
        %v1900 = vpop.f32.mrf.mxu0
        %1901 = vmatprep.mubr.f32.mxu0 0.0
        %1902 = vmatmul.mubr.f32.gmra.mxu0 %v1684
        %v1903 = vpop.f32.mrf.mxu0
        %v1904 = vadd.f32 %v1715, %v1903
        %v1905 = vpop.f32.mrf.mxu0
        %1906 = vmatprep.mubr.f32.mxu0 0.0
        %1907 = vmatmul.mubr.f32.gmra.mxu0 %v1685
        %v1908 = vpop.f32.mrf.mxu0
        %v1909 = vadd.f32 %v1715, %v1908
        %v1910 = vpop.f32.mrf.mxu0
        %1911 = vmatprep.mubr.f32.mxu0 0.0
        %1912 = vmatmul.mubr.f32.gmra.mxu0 %v1686
        %v1913 = vpop.f32.mrf.mxu0
        %v1914 = vadd.f32 %v1715, %v1913
        %v1915 = vpop.f32.mrf.mxu0
        %1916 = vmatprep.mubr.f32.mxu0 0.0
        %1917 = vmatmul.mubr.f32.gmra.mxu0 %v1687
        %v1918 = vpop.f32.mrf.mxu0
        %v1919 = vadd.f32 %v1715, %v1918
        %v1920 = vpop.f32.mrf.mxu0
        %1921 = vmatprep.mubr.f32.mxu0 0.0
        %1922 = vmatmul.mubr.f32.gmra.mxu0 %v1688
        %v1923 = vpop.f32.mrf.mxu0
        %v1924 = vadd.f32 %v1715, %v1923
        %v1925 = vpop.f32.mrf.mxu0
        %1926 = vmatprep.mubr.f32.mxu0 0.0
        %1927 = vmatmul.mubr.f32.gmra.mxu0 %v1689
        %v1928 = vpop.f32.mrf.mxu0
        %v1929 = vadd.f32 %v1715, %v1928
        %v1930 = vpop.f32.mrf.mxu0
        %1931 = vmatprep.mubr.f32.mxu0 0.0
        %1932 = vmatmul.mubr.f32.gmra.mxu0 %v1690
        %v1933 = vpop.f32.mrf.mxu0
        %v1934 = vadd.f32 %v1715, %v1933
        %v1935 = vpop.f32.mrf.mxu0
        %1936 = vmatprep.mubr.f32.mxu0 0.0
        %1937 = vmatmul.mubr.f32.gmra.mxu0 %v1691
        %v1938 = vpop.f32.mrf.mxu0
        %v1939 = vadd.f32 %v1715, %v1938
        %v1940 = vpop.f32.mrf.mxu0
        %1941 = vdwg.mxu0
        %1942 = vrot.lane.b32.xlu0 %v220, 1
        %v1943 = vpop.permute.xlu0 %1942
        %1944 = vrot.lane.b32.xlu0 %v221, 1
        %v1945 = vpop.permute.xlu0 %1944
        %1946 = vrot.lane.b32.xlu0 %v222, 1
        %v1947 = vpop.permute.xlu0 %1946
        %1948 = vrot.lane.b32.xlu0 %v223, 1
        %v1949 = vpop.permute.xlu0 %1948
        %1950 = vrot.lane.b32.xlu0 %v224, 1
        %v1951 = vpop.permute.xlu0 %1950
        %1952 = vrot.lane.b32.xlu0 %v225, 1
        %v1953 = vpop.permute.xlu0 %1952
        %1954 = vrot.lane.b32.xlu0 %v226, 1
        %v1955 = vpop.permute.xlu0 %1954
        %1956 = vrot.lane.b32.xlu0 %v227, 1
        %v1957 = vpop.permute.xlu0 %1956
        %1958 = vrot.lane.b32.xlu0 %v228, 1
        %v1959 = vpop.permute.xlu0 %1958
        %1960 = vrot.lane.b32.xlu0 %v229, 1
        %v1961 = vpop.permute.xlu0 %1960
        %1962 = vrot.lane.b32.xlu0 %v230, 1
        %v1963 = vpop.permute.xlu0 %1962
        %1964 = vrot.lane.b32.xlu0 %v231, 1
        %v1965 = vpop.permute.xlu0 %1964
        %1966 = vrot.lane.b32.xlu0 %v232, 1
        %v1967 = vpop.permute.xlu0 %1966
        %1968 = vrot.lane.b32.xlu0 %v233, 1
        %v1969 = vpop.permute.xlu0 %1968
        %1970 = vrot.lane.b32.xlu0 %v234, 1
        %v1971 = vpop.permute.xlu0 %1970
        %1972 = vrot.lane.b32.xlu0 %v235, 1
        %v1973 = vpop.permute.xlu0 %1972
        %1974 = vrot.lane.b32.xlu0 %v236, 1
        %v1975 = vpop.permute.xlu0 %1974
        %1976 = vrot.lane.b32.xlu0 %v237, 1
        %v1977 = vpop.permute.xlu0 %1976
        %1978 = vrot.lane.b32.xlu0 %v238, 1
        %v1979 = vpop.permute.xlu0 %1978
        %1980 = vrot.lane.b32.xlu0 %v239, 1
        %v1981 = vpop.permute.xlu0 %1980
        %1982 = vrot.lane.b32.xlu0 %v240, 1
        %v1983 = vpop.permute.xlu0 %1982
        %1984 = vrot.lane.b32.xlu0 %v241, 1
        %v1985 = vpop.permute.xlu0 %1984
        %1986 = vrot.lane.b32.xlu0 %v242, 1
        %v1987 = vpop.permute.xlu0 %1986
        %1988 = vrot.lane.b32.xlu0 %v243, 1
        %v1989 = vpop.permute.xlu0 %1988
        %1990 = vrot.lane.b32.xlu0 %v244, 1
        %v1991 = vpop.permute.xlu0 %1990
        %1992 = vrot.lane.b32.xlu0 %v245, 1
        %v1993 = vpop.permute.xlu0 %1992
        %1994 = vrot.lane.b32.xlu0 %v246, 1
        %v1995 = vpop.permute.xlu0 %1994
        %1996 = vrot.lane.b32.xlu0 %v247, 1
        %v1997 = vpop.permute.xlu0 %1996
        %1998 = vrot.lane.b32.xlu0 %v248, 1
        %v1999 = vpop.permute.xlu0 %1998
        %2000 = vrot.lane.b32.xlu0 %v249, 1
        %v2001 = vpop.permute.xlu0 %2000
        %2002 = vrot.lane.b32.xlu0 %v250, 1
        %v2003 = vpop.permute.xlu0 %2002
        %2004 = vrot.lane.b32.xlu0 %v251, 1
        %v2005 = vpop.permute.xlu0 %2004
        %v2006 = vadd.f32 %v1784, %v1943
        %v2007 = vadd.f32 %v1789, %v1945
        %v2008 = vadd.f32 %v1794, %v1947
        %v2009 = vadd.f32 %v1799, %v1949
        %v2010 = vadd.f32 %v1804, %v1951
        %v2011 = vadd.f32 %v1809, %v1953
        %v2012 = vadd.f32 %v1814, %v1955
        %v2013 = vadd.f32 %v1819, %v1957
        %v2014 = vadd.f32 %v1824, %v1959
        %v2015 = vadd.f32 %v1829, %v1961
        %v2016 = vadd.f32 %v1834, %v1963
        %v2017 = vadd.f32 %v1839, %v1965
        %v2018 = vadd.f32 %v1844, %v1967
        %v2019 = vadd.f32 %v1849, %v1969
        %v2020 = vadd.f32 %v1854, %v1971
        %v2021 = vadd.f32 %v1859, %v1973
        %v2022 = vadd.f32 %v1864, %v1975
        %v2023 = vadd.f32 %v1869, %v1977
        %v2024 = vadd.f32 %v1874, %v1979
        %v2025 = vadd.f32 %v1879, %v1981
        %v2026 = vadd.f32 %v1884, %v1983
        %v2027 = vadd.f32 %v1889, %v1985
        %v2028 = vadd.f32 %v1894, %v1987
        %v2029 = vadd.f32 %v1899, %v1989
        %v2030 = vadd.f32 %v1904, %v1991
        %v2031 = vadd.f32 %v1909, %v1993
        %v2032 = vadd.f32 %v1914, %v1995
        %v2033 = vadd.f32 %v1919, %v1997
        %v2034 = vadd.f32 %v1924, %v1999
        %v2035 = vadd.f32 %v1929, %v2001
        %v2036 = vadd.f32 %v1934, %v2003
        %v2037 = vadd.f32 %v1939, %v2005
        %2038 = vst [vmem:[%s179] sm:$0xff] %v2006
        %2039 = vst [vmem:[%s179 + $0x8] sm:$0xff] %v2007
        %2040 = vst [vmem:[%s179 + $0x10] sm:$0xff] %v2008
        %2041 = vst [vmem:[%s179 + $0x18] sm:$0xff] %v2009
        %2042 = vst [vmem:[%s179 + $0x20] sm:$0xff] %v2010
        %2043 = vst [vmem:[%s179 + $0x28] sm:$0xff] %v2011
        %2044 = vst [vmem:[%s179 + $0x30] sm:$0xff] %v2012
        %2045 = vst [vmem:[%s179 + $0x38] sm:$0xff] %v2013
        %2046 = vst [vmem:[%s179 + $0x40] sm:$0xff] %v2014
        %2047 = vst [vmem:[%s179 + $0x48] sm:$0xff] %v2015
        %2048 = vst [vmem:[%s179 + $0x50] sm:$0xff] %v2016
        %2049 = vst [vmem:[%s179 + $0x58] sm:$0xff] %v2017
        %2050 = vst [vmem:[%s179 + $0x60] sm:$0xff] %v2018
        %2051 = vst [vmem:[%s179 + $0x68] sm:$0xff] %v2019
        %2052 = vst [vmem:[%s179 + $0x70] sm:$0xff] %v2020
        %2053 = vst [vmem:[%s179 + $0x78] sm:$0xff] %v2021
        %2054 = vst [vmem:[%s179 + $0x80] sm:$0xff] %v2022
        %2055 = vst [vmem:[%s179 + $0x88] sm:$0xff] %v2023
        %2056 = vst [vmem:[%s179 + $0x90] sm:$0xff] %v2024
        %2057 = vst [vmem:[%s179 + $0x98] sm:$0xff] %v2025
        %2058 = vst [vmem:[%s179 + $0xa0] sm:$0xff] %v2026
        %2059 = vst [vmem:[%s179 + $0xa8] sm:$0xff] %v2027
        %2060 = vst [vmem:[%s179 + $0xb0] sm:$0xff] %v2028
        %2061 = vst [vmem:[%s179 + $0xb8] sm:$0xff] %v2029
        %2062 = vst [vmem:[%s179 + $0xc0] sm:$0xff] %v2030
        %2063 = vst [vmem:[%s179 + $0xc8] sm:$0xff] %v2031
        %2064 = vst [vmem:[%s179 + $0xd0] sm:$0xff] %v2032
        %2065 = vst [vmem:[%s179 + $0xd8] sm:$0xff] %v2033
        %2066 = vst [vmem:[%s179 + $0xe0] sm:$0xff] %v2034
        %2067 = vst [vmem:[%s179 + $0xe8] sm:$0xff] %v2035
        %2068 = vst [vmem:[%s179 + $0xf0] sm:$0xff] %v2036
        %2069 = vst [vmem:[%s179 + $0xf8] sm:$0xff] %v2037
        %s2070 = sand.u32 %s94, 1
        %s2071 = scalar_lea.sflag [#allocation4], %s2070
        %s2072 = sand.u32 %s94, 1
        %s2073 = smul.addr %s2072, 256
        %s2074 = scalar_lea.vmem [#allocation5], %s2073
        // Predicated region
        $region37: #{tpu_custom_call.1} parent=31 // pred_check
          %p2075 = pneg %p104
        $region38: #{tpu_custom_call.1} parent=31 // pred_check_branch
          %2077 = sbr.rel (%p2075) target = $region40
        $region39: #{tpu_custom_call.1} parent=31 // pred_region
          %s2078 = smul.u32 32, %s18
          %s2080 = ssub.s32 4096, 4096
          %2081 = vsyncadd %s2071, %s2080
          %s2082 = smul.addr %s2078, 128
          %s2083 = scalar_lea.hbm %s3, %s2082
          %s2084 = sshll.u32 %s2074, 4
          %s2085 = int_to_ptr.vmem [resolvable:$true] %s2084
          %2090 = dma.vmem_to_hbm [thread:$0]  %s2085, 4096, %s2083, %s2071, 128, 128, 8
        $region40: #{tpu_custom_call.1} parent=31 // pred_fallthru
          _
      $region32: #{tpu_custom_call.1} parent=5 // pred_fallthru
        _
      %p2091 = scmp.le.s32.totalorder 2, %s13
      // Predicated region
      $region41: #{tpu_custom_call.1} parent=5 // pred_check
        %p2092 = pneg %p2091
      $region42: #{tpu_custom_call.1} parent=5 // pred_check_branch
        %2094 = sbr.rel (%p2092) target = $region44
      $region43: #{tpu_custom_call.1} parent=5 // pred_region
        %s2095 = ssub.s32 %s13, 2
        // Predicated region
        $region45: #{tpu_custom_call.1} parent=43 // pred_check
          %p2096 = pneg %p110
        $region46: #{tpu_custom_call.1} parent=43 // pred_check_branch
          %2098 = sbr.rel (%p2096) target = $region48
        $region47: #{tpu_custom_call.1} parent=43 // pred_region
          %s2099 = sand.u32 %s95, 1
          %s2100 = scalar_lea.sflag [#allocation4], %s2099
          %s2101 = sand.u32 %s95, 1
          %s2102 = smul.addr %s2101, 256
          %s2103 = scalar_lea.vmem [#allocation5], %s2102
          %2104 = dma.done %s2100, 4096
        $region48: #{tpu_custom_call.1} parent=43 // pred_fallthru
          _
      $region44: #{tpu_custom_call.1} parent=5 // pred_fallthru
        _
    $region6: #{tpu_custom_call.1} parent=1 // loop_footer
      %s17 = sadd.s32 1, %s13
    $region7: #{tpu_custom_call.1} parent=1 // loop_footer_branch
      %12 = sbr.rel target = $region3
    $region8: #{tpu_custom_call.1} parent=1 // loop_exit
      _
    %2105 = vsyncpa [#allocation3], 1
    %s2106 = scalar_lea.sflag [#allocation3], 1
    %2107 = vsyncpa %s2106, 1
    %2108 = vsyncpa [#allocation4], 1
    %s2109 = scalar_lea.sflag [#allocation4], 1
    %2110 = vsyncpa %s2109, 1

</llo_original>
